<compile_context>
chip_gen: v5e
topology: v5e:2x2
jax: 0.10.0
libtpu: 0.0.40
codegen_flags: <defaults>
</compile_context>

<pallas_src>
import functools

import jax
import jax.numpy as jnp
from jax import lax
from jax.experimental import pallas as pl
from jax.experimental.pallas import tpu as pltpu


HIDDEN = 128  # fixed by the module: nn.LSTM(embed_dim, 128)


def lstm_fc_kernel(pre_ref, whh_ref, wfc_ref, bfc_ref, out_ref, h_sc, c_sc):
    """Serial LSTM recurrence over one sequence chunk + final Linear.

    pre_ref: (seq_chunk, bt, 4*H) f32  gathered fused-table rows (x@W_ih + b), time-major
    whh_ref: (H, 4*H)             f32  hidden->gates weights (pre-transposed)
    wfc_ref: (H, out_pad)         f32  fc weight (pre-transposed, lane-padded)
    bfc_ref: (1, out_pad)         f32  fc bias (lane-padded)
    out_ref: (bt, out_pad)        f32  written on the last sequence chunk only
    h_sc / c_sc: (bt, H) f32 scratch, carried across the sequence-chunk grid axis
    """
    H = HIDDEN
    seq_chunk = pre_ref.shape[0]
    si = pl.program_id(1)

    @pl.when(si == 0)
    def _():
        h_sc[...] = jnp.zeros_like(h_sc)
        c_sc[...] = jnp.zeros_like(c_sc)

    def step(t, carry):
        # One MXU push per step; gate slices are 128-lane aligned (no XLU traffic),
        # sigmoid/tanh land on the otherwise-idle EUP slot.
        gates = pre_ref[t] + jnp.dot(h_sc[...], whh_ref[...],
                                     preferred_element_type=jnp.float32)
        i_g = jax.nn.sigmoid(gates[:, 0 * H:1 * H])
        f_g = jax.nn.sigmoid(gates[:, 1 * H:2 * H])
        g_g = jnp.tanh(gates[:, 2 * H:3 * H])
        o_g = jax.nn.sigmoid(gates[:, 3 * H:4 * H])
        c_new = f_g * c_sc[...] + i_g * g_g
        c_sc[...] = c_new
        h_sc[...] = o_g * jnp.tanh(c_new)
        return carry

    # Bounded unroll: LLO scheduling visibility without compile-time / vreg blowup at
    # long sequence lengths (the chain is serial through h/c anyway).
    lax.fori_loop(0, seq_chunk, step, 0, unroll=min(seq_chunk, 8))

    @pl.when(si == pl.num_programs(1) - 1)
    def _():
        out_ref[...] = (
            jnp.dot(h_sc[...], wfc_ref[...], preferred_element_type=jnp.float32)
            + bfc_ref[...]
        ).astype(out_ref.dtype)


def init_params(key, vocab_size=1000, embed_dim=64, output_size=10, hidden=HIDDEN):
    """Deterministic synthetic parameters matching the PyTorch module's shapes."""
    ks = jax.random.split(key, 7)
    s = 1.0 / jnp.sqrt(hidden)
    params = {
        "embedding": jax.random.normal(ks[0], (vocab_size, embed_dim), jnp.float32),
        # PyTorch nn.LSTM weight layout: (4*hidden, in) with gate order [i, f, g, o]
        "w_ih": jax.random.uniform(ks[1], (4 * hidden, embed_dim), jnp.float32, -s, s),
        "w_hh": jax.random.uniform(ks[2], (4 * hidden, hidden), jnp.float32, -s, s),
        "b_ih": jax.random.uniform(ks[3], (4 * hidden,), jnp.float32, -s, s),
        "b_hh": jax.random.uniform(ks[4], (4 * hidden,), jnp.float32, -s, s),
        # nn.Linear(128, output_size): weight (out, in), bias (out,)
        "w_fc": jax.random.uniform(ks[5], (output_size, hidden), jnp.float32, -s, s),
        "b_fc": jax.random.uniform(ks[6], (output_size,), jnp.float32, -s, s),
    }
    return params


def prepare_params(params):
    """One-time weight prep (init path): fuse embedding with the LSTM input projection
    and combined bias, transpose W_hh, lane-pad the fc weight/bias. Keeps every per-call
    transpose/cast/pad out of the hot path."""
    hidden = HIDDEN
    output_size = int(params["w_fc"].shape[0])
    out_pad = max(128, ((output_size + 127) // 128) * 128)   # lane-dense output

    bias = (params["b_ih"] + params["b_hh"]).astype(jnp.float32)            # (4H,)
    fused_table = (params["embedding"].astype(jnp.float32)
                   @ params["w_ih"].T.astype(jnp.float32)) + bias           # (vocab, 4H)
    whh_t = params["w_hh"].T.astype(jnp.float32)                            # (H, 4H)
    wfc_pad = jnp.zeros((hidden, out_pad), jnp.float32)
    wfc_pad = wfc_pad.at[:, :output_size].set(params["w_fc"].T.astype(jnp.float32))
    bfc_pad = jnp.zeros((1, out_pad), jnp.float32)
    bfc_pad = bfc_pad.at[:, :output_size].set(params["b_fc"].astype(jnp.float32))

    prepped = {"fused_table": fused_table, "whh_t": whh_t,
               "wfc_pad": wfc_pad, "bfc_pad": bfc_pad}
    return prepped, output_size


def _largest_divisor_leq(n, cap):
    d = max(1, min(n, cap))
    while n % d:
        d -= 1
    return d


def _num_tensorcores():
    """TensorCores per device: 2 on v7x, 1 on v5e/v6e. Falls back to 1 if unknown."""
    try:
        return int(getattr(jax.devices()[0], "num_cores", 1) or 1)
    except Exception:
        return 1


@functools.partial(jax.jit, static_argnames=("output_size", "num_cores"))
def fixed_demo_net_simple(prepped, tokens, *, output_size, num_cores=1):
    """tokens: int32 (batch, seq). Returns (batch, output_size) float32."""
    batch, seq = tokens.shape
    hidden = HIDDEN
    out_pad = prepped["wfc_pad"].shape[1]

    # --- per-call glue: the whole input path is ONE time-major row gather from the
    # fused (embedding @ W_ih.T + b_ih + b_hh) table; no transpose pass, no x@W_ih. ---
    pre_tm = prepped["fused_table"][tokens.T]            # (seq, batch, 4H) f32

    # Batch tile (generation aware): single-TC chips (v5e/v6e) run the whole batch in
    # one grid step; split across the "parallel" axis only with 2 TCs (v7x) and a
    # batch large enough to keep bt a sublane multiple.
    if num_cores > 1 and batch >= 16 and batch % 16 == 0:
        bt = batch // 2
    else:
        bt = batch

    # Stream long sequences through an "arbitrary" grid axis; h/c carry in scratch,
    # so the double-buffered pre block stays VMEM-bounded.
    seq_chunk = _largest_divisor_leq(seq, 128)
    grid = (batch // bt, seq // seq_chunk)

    out = pl.pallas_call(
        lstm_fc_kernel,
        out_shape=jax.ShapeDtypeStruct((batch, out_pad), jnp.float32),
        grid_spec=pltpu.PrefetchScalarGridSpec(
            num_scalar_prefetch=0,
            grid=grid,
            in_specs=[
                pl.BlockSpec((seq_chunk, bt, 4 * hidden), lambda bi, si: (si, bi, 0)),
                pl.BlockSpec((hidden, 4 * hidden), lambda bi, si: (0, 0)),
                pl.BlockSpec((hidden, out_pad), lambda bi, si: (0, 0)),
                pl.BlockSpec((1, out_pad), lambda bi, si: (0, 0)),
            ],
            out_specs=pl.BlockSpec((bt, out_pad), lambda bi, si: (bi, 0)),
            scratch_shapes=[
                pltpu.VMEM((bt, hidden), jnp.float32),   # h (carried across seq chunks)
                pltpu.VMEM((bt, hidden), jnp.float32),   # c (carried across seq chunks)
            ],
        ),
        compiler_params=pltpu.CompilerParams(
            dimension_semantics=("parallel", "arbitrary")),
    )(pre_tm, prepped["whh_t"], prepped["wfc_pad"], prepped["bfc_pad"])

    return out[:, :output_size]


def reference_forward(params, tokens):
    """Pure-JAX f32 reference matching PyTorch semantics (for validation)."""
    hidden = HIDDEN
    emb = params["embedding"][tokens]                # (batch, seq, embed)
    batch, seq, _ = emb.shape
    h = jnp.zeros((batch, hidden), jnp.float32)
    c = jnp.zeros((batch, hidden), jnp.float32)
    wih_t = params["w_ih"].T
    whh_t = params["w_hh"].T
    b = params["b_ih"] + params["b_hh"]

    def step(carry, x_t):
        h, c = carry
        gates = x_t @ wih_t + h @ whh_t + b
        i = jax.nn.sigmoid(gates[:, 0 * hidden:1 * hidden])
        f = jax.nn.sigmoid(gates[:, 1 * hidden:2 * hidden])
        g = jnp.tanh(gates[:, 2 * hidden:3 * hidden])
        o = jax.nn.sigmoid(gates[:, 3 * hidden:4 * hidden])
        c = f * c + i * g
        h = o * jnp.tanh(c)
        return (h, c), None

    (h, _), _ = lax.scan(step, (h, c), jnp.transpose(emb, (1, 0, 2)))
    return h @ params["w_fc"].T + params["b_fc"]


if __name__ == "__main__":
    key = jax.random.PRNGKey(0)
    pkey, tkey = jax.random.split(key)

    vocab_size, embed_dim, output_size = 1000, 64, 10
    batch, seq = 2, 8

    params = init_params(pkey, vocab_size, embed_dim, output_size)
    tokens = jax.random.randint(tkey, (batch, seq), 0, vocab_size, dtype=jnp.int32)

    prepped, out_size = prepare_params(params)
    out = fixed_demo_net_simple(prepped, tokens, output_size=out_size,
                                num_cores=_num_tensorcores())
    out = jax.block_until_ready(out)

    ref = jax.block_until_ready(reference_forward(params, tokens))
    assert out.shape == (batch, output_size)
    assert jnp.allclose(out, ref, atol=2e-2, rtol=2e-2), (
        f"max abs diff {jnp.max(jnp.abs(out - ref))}")

    print("KERNEL_OK")
</pallas_src>

<mosaic_0001>
module attributes {stable_mosaic.version = 11 : i64} {
  func.func @lstm_fc_kernel(%arg0: i32, %arg1: i32, %arg2: memref<8x2x512xf32, #tpu.memory_space<vmem>>, %arg3: memref<128x512xf32, #tpu.memory_space<vmem>>, %arg4: memref<128x128xf32, #tpu.memory_space<vmem>>, %arg5: memref<1x128xf32, #tpu.memory_space<vmem>>, %arg6: memref<2x128xf32, #tpu.memory_space<vmem>>, %arg7: memref<2x128xf32, #tpu.memory_space<vmem>>, %arg8: memref<2x128xf32, #tpu.memory_space<vmem>>) attributes {dimension_semantics = [#tpu.dimension_semantics<parallel>, #tpu.dimension_semantics<arbitrary>], iteration_bounds = array<i64: 1, 1>, scalar_prefetch = 0 : i64, scratch_operands = 2 : i64, tpu.core_type = #tpu.core_type<tc>, window_params = [{transform_indices = @transform_0, window_bounds = array<i64: 8, 2, 512>}, {pipeline_mode = #tpu.pipeline_mode<synchronous>, transform_indices = @transform_1, window_bounds = array<i64: 128, 512>}, {pipeline_mode = #tpu.pipeline_mode<synchronous>, transform_indices = @transform_2, window_bounds = array<i64: 128, 128>}, {pipeline_mode = #tpu.pipeline_mode<synchronous>, transform_indices = @transform_3, window_bounds = array<i64: 1, 128>}, {transform_indices = @transform_4, window_bounds = array<i64: 2, 128>}]} {
    %c0_i32 = arith.constant 0 : i32
    %0 = arith.cmpi eq, %arg1, %c0_i32 : i32
    %1 = arith.extui %0 : i1 to i32
    %c0_i32_0 = arith.constant 0 : i32
    %2 = arith.cmpi ne, %1, %c0_i32_0 : i32
    scf.if %2 {
      %cst_130 = arith.constant 0.000000e+00 : f32
      %286 = vector.broadcast %cst_130 : f32 to vector<2x128xf32>
      %c0_131 = arith.constant 0 : index
      %c0_132 = arith.constant 0 : index
      %287 = vector.load %arg7[%c0_131, %c0_132] : memref<2x128xf32, #tpu.memory_space<vmem>>, vector<2x128xf32>
      tpu.vector_store %arg7[%c0_131, %c0_132], %286 {strides = array<i32>} : memref<2x128xf32, #tpu.memory_space<vmem>>, vector<2x128xf32>,
      %cst_133 = arith.constant 0.000000e+00 : f32
      %288 = vector.broadcast %cst_133 : f32 to vector<2x128xf32>
      %c0_134 = arith.constant 0 : index
      %c0_135 = arith.constant 0 : index
      %289 = vector.load %arg8[%c0_134, %c0_135] : memref<2x128xf32, #tpu.memory_space<vmem>>, vector<2x128xf32>
      tpu.vector_store %arg8[%c0_134, %c0_135], %288 {strides = array<i32>} : memref<2x128xf32, #tpu.memory_space<vmem>>, vector<2x128xf32>,
    } else {
    }
    %c0_i32_1 = arith.constant 0 : i32
    %3 = arith.index_cast %c0_i32_1 : i32 to index
    %c0 = arith.constant 0 : index
    %c0_2 = arith.constant 0 : index
    %4 = vector.load %arg2[%3, %c0, %c0_2] : memref<8x2x512xf32, #tpu.memory_space<vmem>>, vector<1x2x512xf32>
    %5 = vector.shape_cast %4 : vector<1x2x512xf32> to vector<2x512xf32>
    %c0_3 = arith.constant 0 : index
    %c0_4 = arith.constant 0 : index
    %6 = vector.load %arg7[%c0_3, %c0_4] : memref<2x128xf32, #tpu.memory_space<vmem>>, vector<2x128xf32>
    %c0_5 = arith.constant 0 : index
    %c0_6 = arith.constant 0 : index
    %7 = vector.load %arg3[%c0_5, %c0_6] : memref<128x512xf32, #tpu.memory_space<vmem>>, vector<128x512xf32>
    %cst = arith.constant dense<0.000000e+00> : vector<2x512xf32>
    %8 = tpu.matmul %6, %7, %cst {dimension_numbers = #tpu.dot_dimension_numbers<[1], [0], [0], [1], [0, 0, 1, 1], [], []>} : vector<2x128xf32>, vector<128x512xf32>, vector<2x512xf32> -> vector<2x512xf32>
    %9 = arith.addf %5, %8 : vector<2x512xf32>
    %10 = vector.extract_strided_slice %9 {offsets = [0, 0], sizes = [2, 128], strides = [1, 1]} : vector<2x512xf32> to vector<2x128xf32>
    %11 = arith.negf %10 : vector<2x128xf32>
    %12 = math.exp %11 : vector<2x128xf32>
    %cst_7 = arith.constant 1.000000e+00 : f32
    %13 = vector.broadcast %cst_7 : f32 to vector<2x128xf32>
    %14 = arith.addf %13, %12 : vector<2x128xf32>
    %15 = arith.divf %13, %14 : vector<2x128xf32>
    %16 = vector.extract_strided_slice %9 {offsets = [0, 128], sizes = [2, 128], strides = [1, 1]} : vector<2x512xf32> to vector<2x128xf32>
    %17 = arith.negf %16 : vector<2x128xf32>
    %18 = math.exp %17 : vector<2x128xf32>
    %cst_8 = arith.constant 1.000000e+00 : f32
    %19 = vector.broadcast %cst_8 : f32 to vector<2x128xf32>
    %20 = arith.addf %19, %18 : vector<2x128xf32>
    %21 = arith.divf %19, %20 : vector<2x128xf32>
    %22 = vector.extract_strided_slice %9 {offsets = [0, 256], sizes = [2, 128], strides = [1, 1]} : vector<2x512xf32> to vector<2x128xf32>
    %23 = math.tanh %22 : vector<2x128xf32>
    %24 = vector.extract_strided_slice %9 {offsets = [0, 384], sizes = [2, 128], strides = [1, 1]} : vector<2x512xf32> to vector<2x128xf32>
    %25 = arith.negf %24 : vector<2x128xf32>
    %26 = math.exp %25 : vector<2x128xf32>
    %cst_9 = arith.constant 1.000000e+00 : f32
    %27 = vector.broadcast %cst_9 : f32 to vector<2x128xf32>
    %28 = arith.addf %27, %26 : vector<2x128xf32>
    %29 = arith.divf %27, %28 : vector<2x128xf32>
    %c0_10 = arith.constant 0 : index
    %c0_11 = arith.constant 0 : index
    %30 = vector.load %arg8[%c0_10, %c0_11] : memref<2x128xf32, #tpu.memory_space<vmem>>, vector<2x128xf32>
    %31 = arith.mulf %21, %30 : vector<2x128xf32>
    %32 = arith.mulf %15, %23 : vector<2x128xf32>
    %33 = arith.addf %31, %32 : vector<2x128xf32>
    %c0_12 = arith.constant 0 : index
    %c0_13 = arith.constant 0 : index
    %34 = vector.load %arg8[%c0_12, %c0_13] : memref<2x128xf32, #tpu.memory_space<vmem>>, vector<2x128xf32>
    tpu.vector_store %arg8[%c0_12, %c0_13], %33 {strides = array<i32>} : memref<2x128xf32, #tpu.memory_space<vmem>>, vector<2x128xf32>,
    %35 = math.tanh %33 : vector<2x128xf32>
    %36 = arith.mulf %29, %35 : vector<2x128xf32>
    %c0_14 = arith.constant 0 : index
    %c0_15 = arith.constant 0 : index
    %37 = vector.load %arg7[%c0_14, %c0_15] : memref<2x128xf32, #tpu.memory_space<vmem>>, vector<2x128xf32>
    tpu.vector_store %arg7[%c0_14, %c0_15], %36 {strides = array<i32>} : memref<2x128xf32, #tpu.memory_space<vmem>>, vector<2x128xf32>,
    %c1_i32 = arith.constant 1 : i32
    %38 = arith.index_cast %c1_i32 : i32 to index
    %c0_16 = arith.constant 0 : index
    %c0_17 = arith.constant 0 : index
    %39 = vector.load %arg2[%38, %c0_16, %c0_17] : memref<8x2x512xf32, #tpu.memory_space<vmem>>, vector<1x2x512xf32>
    %40 = vector.shape_cast %39 : vector<1x2x512xf32> to vector<2x512xf32>
    %c0_18 = arith.constant 0 : index
    %c0_19 = arith.constant 0 : index
    %41 = vector.load %arg7[%c0_18, %c0_19] : memref<2x128xf32, #tpu.memory_space<vmem>>, vector<2x128xf32>
    %c0_20 = arith.constant 0 : index
    %c0_21 = arith.constant 0 : index
    %42 = vector.load %arg3[%c0_20, %c0_21] : memref<128x512xf32, #tpu.memory_space<vmem>>, vector<128x512xf32>
    %cst_22 = arith.constant dense<0.000000e+00> : vector<2x512xf32>
    %43 = tpu.matmul %41, %42, %cst_22 {dimension_numbers = #tpu.dot_dimension_numbers<[1], [0], [0], [1], [0, 0, 1, 1], [], []>} : vector<2x128xf32>, vector<128x512xf32>, vector<2x512xf32> -> vector<2x512xf32>
    %44 = arith.addf %40, %43 : vector<2x512xf32>
    %45 = vector.extract_strided_slice %44 {offsets = [0, 0], sizes = [2, 128], strides = [1, 1]} : vector<2x512xf32> to vector<2x128xf32>
    %46 = arith.negf %45 : vector<2x128xf32>
    %47 = math.exp %46 : vector<2x128xf32>
    %cst_23 = arith.constant 1.000000e+00 : f32
    %48 = vector.broadcast %cst_23 : f32 to vector<2x128xf32>
    %49 = arith.addf %48, %47 : vector<2x128xf32>
    %50 = arith.divf %48, %49 : vector<2x128xf32>
    %51 = vector.extract_strided_slice %44 {offsets = [0, 128], sizes = [2, 128], strides = [1, 1]} : vector<2x512xf32> to vector<2x128xf32>
    %52 = arith.negf %51 : vector<2x128xf32>
    %53 = math.exp %52 : vector<2x128xf32>
    %cst_24 = arith.constant 1.000000e+00 : f32
    %54 = vector.broadcast %cst_24 : f32 to vector<2x128xf32>
    %55 = arith.addf %54, %53 : vector<2x128xf32>
    %56 = arith.divf %54, %55 : vector<2x128xf32>
    %57 = vector.extract_strided_slice %44 {offsets = [0, 256], sizes = [2, 128], strides = [1, 1]} : vector<2x512xf32> to vector<2x128xf32>
    %58 = math.tanh %57 : vector<2x128xf32>
    %59 = vector.extract_strided_slice %44 {offsets = [0, 384], sizes = [2, 128], strides = [1, 1]} : vector<2x512xf32> to vector<2x128xf32>
    %60 = arith.negf %59 : vector<2x128xf32>
    %61 = math.exp %60 : vector<2x128xf32>
    %cst_25 = arith.constant 1.000000e+00 : f32
    %62 = vector.broadcast %cst_25 : f32 to vector<2x128xf32>
    %63 = arith.addf %62, %61 : vector<2x128xf32>
    %64 = arith.divf %62, %63 : vector<2x128xf32>
    %c0_26 = arith.constant 0 : index
    %c0_27 = arith.constant 0 : index
    %65 = vector.load %arg8[%c0_26, %c0_27] : memref<2x128xf32, #tpu.memory_space<vmem>>, vector<2x128xf32>
    %66 = arith.mulf %56, %65 : vector<2x128xf32>
    %67 = arith.mulf %50, %58 : vector<2x128xf32>
    %68 = arith.addf %66, %67 : vector<2x128xf32>
    %c0_28 = arith.constant 0 : index
    %c0_29 = arith.constant 0 : index
    %69 = vector.load %arg8[%c0_28, %c0_29] : memref<2x128xf32, #tpu.memory_space<vmem>>, vector<2x128xf32>
    tpu.vector_store %arg8[%c0_28, %c0_29], %68 {strides = array<i32>} : memref<2x128xf32, #tpu.memory_space<vmem>>, vector<2x128xf32>,
    %70 = math.tanh %68 : vector<2x128xf32>
    %71 = arith.mulf %64, %70 : vector<2x128xf32>
    %c0_30 = arith.constant 0 : index
    %c0_31 = arith.constant 0 : index
    %72 = vector.load %arg7[%c0_30, %c0_31] : memref<2x128xf32, #tpu.memory_space<vmem>>, vector<2x128xf32>
    tpu.vector_store %arg7[%c0_30, %c0_31], %71 {strides = array<i32>} : memref<2x128xf32, #tpu.memory_space<vmem>>, vector<2x128xf32>,
    %c2_i32 = arith.constant 2 : i32
    %73 = arith.index_cast %c2_i32 : i32 to index
    %c0_32 = arith.constant 0 : index
    %c0_33 = arith.constant 0 : index
    %74 = vector.load %arg2[%73, %c0_32, %c0_33] : memref<8x2x512xf32, #tpu.memory_space<vmem>>, vector<1x2x512xf32>
    %75 = vector.shape_cast %74 : vector<1x2x512xf32> to vector<2x512xf32>
    %c0_34 = arith.constant 0 : index
    %c0_35 = arith.constant 0 : index
    %76 = vector.load %arg7[%c0_34, %c0_35] : memref<2x128xf32, #tpu.memory_space<vmem>>, vector<2x128xf32>
    %c0_36 = arith.constant 0 : index
    %c0_37 = arith.constant 0 : index
    %77 = vector.load %arg3[%c0_36, %c0_37] : memref<128x512xf32, #tpu.memory_space<vmem>>, vector<128x512xf32>
    %cst_38 = arith.constant dense<0.000000e+00> : vector<2x512xf32>
    %78 = tpu.matmul %76, %77, %cst_38 {dimension_numbers = #tpu.dot_dimension_numbers<[1], [0], [0], [1], [0, 0, 1, 1], [], []>} : vector<2x128xf32>, vector<128x512xf32>, vector<2x512xf32> -> vector<2x512xf32>
    %79 = arith.addf %75, %78 : vector<2x512xf32>
    %80 = vector.extract_strided_slice %79 {offsets = [0, 0], sizes = [2, 128], strides = [1, 1]} : vector<2x512xf32> to vector<2x128xf32>
    %81 = arith.negf %80 : vector<2x128xf32>
    %82 = math.exp %81 : vector<2x128xf32>
    %cst_39 = arith.constant 1.000000e+00 : f32
    %83 = vector.broadcast %cst_39 : f32 to vector<2x128xf32>
    %84 = arith.addf %83, %82 : vector<2x128xf32>
    %85 = arith.divf %83, %84 : vector<2x128xf32>
    %86 = vector.extract_strided_slice %79 {offsets = [0, 128], sizes = [2, 128], strides = [1, 1]} : vector<2x512xf32> to vector<2x128xf32>
    %87 = arith.negf %86 : vector<2x128xf32>
    %88 = math.exp %87 : vector<2x128xf32>
    %cst_40 = arith.constant 1.000000e+00 : f32
    %89 = vector.broadcast %cst_40 : f32 to vector<2x128xf32>
    %90 = arith.addf %89, %88 : vector<2x128xf32>
    %91 = arith.divf %89, %90 : vector<2x128xf32>
    %92 = vector.extract_strided_slice %79 {offsets = [0, 256], sizes = [2, 128], strides = [1, 1]} : vector<2x512xf32> to vector<2x128xf32>
    %93 = math.tanh %92 : vector<2x128xf32>
    %94 = vector.extract_strided_slice %79 {offsets = [0, 384], sizes = [2, 128], strides = [1, 1]} : vector<2x512xf32> to vector<2x128xf32>
    %95 = arith.negf %94 : vector<2x128xf32>
    %96 = math.exp %95 : vector<2x128xf32>
    %cst_41 = arith.constant 1.000000e+00 : f32
    %97 = vector.broadcast %cst_41 : f32 to vector<2x128xf32>
    %98 = arith.addf %97, %96 : vector<2x128xf32>
    %99 = arith.divf %97, %98 : vector<2x128xf32>
    %c0_42 = arith.constant 0 : index
    %c0_43 = arith.constant 0 : index
    %100 = vector.load %arg8[%c0_42, %c0_43] : memref<2x128xf32, #tpu.memory_space<vmem>>, vector<2x128xf32>
    %101 = arith.mulf %91, %100 : vector<2x128xf32>
    %102 = arith.mulf %85, %93 : vector<2x128xf32>
    %103 = arith.addf %101, %102 : vector<2x128xf32>
    %c0_44 = arith.constant 0 : index
    %c0_45 = arith.constant 0 : index
    %104 = vector.load %arg8[%c0_44, %c0_45] : memref<2x128xf32, #tpu.memory_space<vmem>>, vector<2x128xf32>
    tpu.vector_store %arg8[%c0_44, %c0_45], %103 {strides = array<i32>} : memref<2x128xf32, #tpu.memory_space<vmem>>, vector<2x128xf32>,
    %105 = math.tanh %103 : vector<2x128xf32>
    %106 = arith.mulf %99, %105 : vector<2x128xf32>
    %c0_46 = arith.constant 0 : index
    %c0_47 = arith.constant 0 : index
    %107 = vector.load %arg7[%c0_46, %c0_47] : memref<2x128xf32, #tpu.memory_space<vmem>>, vector<2x128xf32>
    tpu.vector_store %arg7[%c0_46, %c0_47], %106 {strides = array<i32>} : memref<2x128xf32, #tpu.memory_space<vmem>>, vector<2x128xf32>,
    %c3_i32 = arith.constant 3 : i32
    %108 = arith.index_cast %c3_i32 : i32 to index
    %c0_48 = arith.constant 0 : index
    %c0_49 = arith.constant 0 : index
    %109 = vector.load %arg2[%108, %c0_48, %c0_49] : memref<8x2x512xf32, #tpu.memory_space<vmem>>, vector<1x2x512xf32>
    %110 = vector.shape_cast %109 : vector<1x2x512xf32> to vector<2x512xf32>
    %c0_50 = arith.constant 0 : index
    %c0_51 = arith.constant 0 : index
    %111 = vector.load %arg7[%c0_50, %c0_51] : memref<2x128xf32, #tpu.memory_space<vmem>>, vector<2x128xf32>
    %c0_52 = arith.constant 0 : index
    %c0_53 = arith.constant 0 : index
    %112 = vector.load %arg3[%c0_52, %c0_53] : memref<128x512xf32, #tpu.memory_space<vmem>>, vector<128x512xf32>
    %cst_54 = arith.constant dense<0.000000e+00> : vector<2x512xf32>
    %113 = tpu.matmul %111, %112, %cst_54 {dimension_numbers = #tpu.dot_dimension_numbers<[1], [0], [0], [1], [0, 0, 1, 1], [], []>} : vector<2x128xf32>, vector<128x512xf32>, vector<2x512xf32> -> vector<2x512xf32>
    %114 = arith.addf %110, %113 : vector<2x512xf32>
    %115 = vector.extract_strided_slice %114 {offsets = [0, 0], sizes = [2, 128], strides = [1, 1]} : vector<2x512xf32> to vector<2x128xf32>
    %116 = arith.negf %115 : vector<2x128xf32>
    %117 = math.exp %116 : vector<2x128xf32>
    %cst_55 = arith.constant 1.000000e+00 : f32
    %118 = vector.broadcast %cst_55 : f32 to vector<2x128xf32>
    %119 = arith.addf %118, %117 : vector<2x128xf32>
    %120 = arith.divf %118, %119 : vector<2x128xf32>
    %121 = vector.extract_strided_slice %114 {offsets = [0, 128], sizes = [2, 128], strides = [1, 1]} : vector<2x512xf32> to vector<2x128xf32>
    %122 = arith.negf %121 : vector<2x128xf32>
    %123 = math.exp %122 : vector<2x128xf32>
    %cst_56 = arith.constant 1.000000e+00 : f32
    %124 = vector.broadcast %cst_56 : f32 to vector<2x128xf32>
    %125 = arith.addf %124, %123 : vector<2x128xf32>
    %126 = arith.divf %124, %125 : vector<2x128xf32>
    %127 = vector.extract_strided_slice %114 {offsets = [0, 256], sizes = [2, 128], strides = [1, 1]} : vector<2x512xf32> to vector<2x128xf32>
    %128 = math.tanh %127 : vector<2x128xf32>
    %129 = vector.extract_strided_slice %114 {offsets = [0, 384], sizes = [2, 128], strides = [1, 1]} : vector<2x512xf32> to vector<2x128xf32>
    %130 = arith.negf %129 : vector<2x128xf32>
    %131 = math.exp %130 : vector<2x128xf32>
    %cst_57 = arith.constant 1.000000e+00 : f32
    %132 = vector.broadcast %cst_57 : f32 to vector<2x128xf32>
    %133 = arith.addf %132, %131 : vector<2x128xf32>
    %134 = arith.divf %132, %133 : vector<2x128xf32>
    %c0_58 = arith.constant 0 : index
    %c0_59 = arith.constant 0 : index
    %135 = vector.load %arg8[%c0_58, %c0_59] : memref<2x128xf32, #tpu.memory_space<vmem>>, vector<2x128xf32>
    %136 = arith.mulf %126, %135 : vector<2x128xf32>
    %137 = arith.mulf %120, %128 : vector<2x128xf32>
    %138 = arith.addf %136, %137 : vector<2x128xf32>
    %c0_60 = arith.constant 0 : index
    %c0_61 = arith.constant 0 : index
    %139 = vector.load %arg8[%c0_60, %c0_61] : memref<2x128xf32, #tpu.memory_space<vmem>>, vector<2x128xf32>
    tpu.vector_store %arg8[%c0_60, %c0_61], %138 {strides = array<i32>} : memref<2x128xf32, #tpu.memory_space<vmem>>, vector<2x128xf32>,
    %140 = math.tanh %138 : vector<2x128xf32>
    %141 = arith.mulf %134, %140 : vector<2x128xf32>
    %c0_62 = arith.constant 0 : index
    %c0_63 = arith.constant 0 : index
    %142 = vector.load %arg7[%c0_62, %c0_63] : memref<2x128xf32, #tpu.memory_space<vmem>>, vector<2x128xf32>
    tpu.vector_store %arg7[%c0_62, %c0_63], %141 {strides = array<i32>} : memref<2x128xf32, #tpu.memory_space<vmem>>, vector<2x128xf32>,
    %c4_i32 = arith.constant 4 : i32
    %143 = arith.index_cast %c4_i32 : i32 to index
    %c0_64 = arith.constant 0 : index
    %c0_65 = arith.constant 0 : index
    %144 = vector.load %arg2[%143, %c0_64, %c0_65] : memref<8x2x512xf32, #tpu.memory_space<vmem>>, vector<1x2x512xf32>
    %145 = vector.shape_cast %144 : vector<1x2x512xf32> to vector<2x512xf32>
    %c0_66 = arith.constant 0 : index
    %c0_67 = arith.constant 0 : index
    %146 = vector.load %arg7[%c0_66, %c0_67] : memref<2x128xf32, #tpu.memory_space<vmem>>, vector<2x128xf32>
    %c0_68 = arith.constant 0 : index
    %c0_69 = arith.constant 0 : index
    %147 = vector.load %arg3[%c0_68, %c0_69] : memref<128x512xf32, #tpu.memory_space<vmem>>, vector<128x512xf32>
    %cst_70 = arith.constant dense<0.000000e+00> : vector<2x512xf32>
    %148 = tpu.matmul %146, %147, %cst_70 {dimension_numbers = #tpu.dot_dimension_numbers<[1], [0], [0], [1], [0, 0, 1, 1], [], []>} : vector<2x128xf32>, vector<128x512xf32>, vector<2x512xf32> -> vector<2x512xf32>
    %149 = arith.addf %145, %148 : vector<2x512xf32>
    %150 = vector.extract_strided_slice %149 {offsets = [0, 0], sizes = [2, 128], strides = [1, 1]} : vector<2x512xf32> to vector<2x128xf32>
    %151 = arith.negf %150 : vector<2x128xf32>
    %152 = math.exp %151 : vector<2x128xf32>
    %cst_71 = arith.constant 1.000000e+00 : f32
    %153 = vector.broadcast %cst_71 : f32 to vector<2x128xf32>
    %154 = arith.addf %153, %152 : vector<2x128xf32>
    %155 = arith.divf %153, %154 : vector<2x128xf32>
    %156 = vector.extract_strided_slice %149 {offsets = [0, 128], sizes = [2, 128], strides = [1, 1]} : vector<2x512xf32> to vector<2x128xf32>
    %157 = arith.negf %156 : vector<2x128xf32>
    %158 = math.exp %157 : vector<2x128xf32>
    %cst_72 = arith.constant 1.000000e+00 : f32
    %159 = vector.broadcast %cst_72 : f32 to vector<2x128xf32>
    %160 = arith.addf %159, %158 : vector<2x128xf32>
    %161 = arith.divf %159, %160 : vector<2x128xf32>
    %162 = vector.extract_strided_slice %149 {offsets = [0, 256], sizes = [2, 128], strides = [1, 1]} : vector<2x512xf32> to vector<2x128xf32>
    %163 = math.tanh %162 : vector<2x128xf32>
    %164 = vector.extract_strided_slice %149 {offsets = [0, 384], sizes = [2, 128], strides = [1, 1]} : vector<2x512xf32> to vector<2x128xf32>
    %165 = arith.negf %164 : vector<2x128xf32>
    %166 = math.exp %165 : vector<2x128xf32>
    %cst_73 = arith.constant 1.000000e+00 : f32
    %167 = vector.broadcast %cst_73 : f32 to vector<2x128xf32>
    %168 = arith.addf %167, %166 : vector<2x128xf32>
    %169 = arith.divf %167, %168 : vector<2x128xf32>
    %c0_74 = arith.constant 0 : index
    %c0_75 = arith.constant 0 : index
    %170 = vector.load %arg8[%c0_74, %c0_75] : memref<2x128xf32, #tpu.memory_space<vmem>>, vector<2x128xf32>
    %171 = arith.mulf %161, %170 : vector<2x128xf32>
    %172 = arith.mulf %155, %163 : vector<2x128xf32>
    %173 = arith.addf %171, %172 : vector<2x128xf32>
    %c0_76 = arith.constant 0 : index
    %c0_77 = arith.constant 0 : index
    %174 = vector.load %arg8[%c0_76, %c0_77] : memref<2x128xf32, #tpu.memory_space<vmem>>, vector<2x128xf32>
    tpu.vector_store %arg8[%c0_76, %c0_77], %173 {strides = array<i32>} : memref<2x128xf32, #tpu.memory_space<vmem>>, vector<2x128xf32>,
    %175 = math.tanh %173 : vector<2x128xf32>
    %176 = arith.mulf %169, %175 : vector<2x128xf32>
    %c0_78 = arith.constant 0 : index
    %c0_79 = arith.constant 0 : index
    %177 = vector.load %arg7[%c0_78, %c0_79] : memref<2x128xf32, #tpu.memory_space<vmem>>, vector<2x128xf32>
    tpu.vector_store %arg7[%c0_78, %c0_79], %176 {strides = array<i32>} : memref<2x128xf32, #tpu.memory_space<vmem>>, vector<2x128xf32>,
    %c5_i32 = arith.constant 5 : i32
    %178 = arith.index_cast %c5_i32 : i32 to index
    %c0_80 = arith.constant 0 : index
    %c0_81 = arith.constant 0 : index
    %179 = vector.load %arg2[%178, %c0_80, %c0_81] : memref<8x2x512xf32, #tpu.memory_space<vmem>>, vector<1x2x512xf32>
    %180 = vector.shape_cast %179 : vector<1x2x512xf32> to vector<2x512xf32>
    %c0_82 = arith.constant 0 : index
    %c0_83 = arith.constant 0 : index
    %181 = vector.load %arg7[%c0_82, %c0_83] : memref<2x128xf32, #tpu.memory_space<vmem>>, vector<2x128xf32>
    %c0_84 = arith.constant 0 : index
    %c0_85 = arith.constant 0 : index
    %182 = vector.load %arg3[%c0_84, %c0_85] : memref<128x512xf32, #tpu.memory_space<vmem>>, vector<128x512xf32>
    %cst_86 = arith.constant dense<0.000000e+00> : vector<2x512xf32>
    %183 = tpu.matmul %181, %182, %cst_86 {dimension_numbers = #tpu.dot_dimension_numbers<[1], [0], [0], [1], [0, 0, 1, 1], [], []>} : vector<2x128xf32>, vector<128x512xf32>, vector<2x512xf32> -> vector<2x512xf32>
    %184 = arith.addf %180, %183 : vector<2x512xf32>
    %185 = vector.extract_strided_slice %184 {offsets = [0, 0], sizes = [2, 128], strides = [1, 1]} : vector<2x512xf32> to vector<2x128xf32>
    %186 = arith.negf %185 : vector<2x128xf32>
    %187 = math.exp %186 : vector<2x128xf32>
    %cst_87 = arith.constant 1.000000e+00 : f32
    %188 = vector.broadcast %cst_87 : f32 to vector<2x128xf32>
    %189 = arith.addf %188, %187 : vector<2x128xf32>
    %190 = arith.divf %188, %189 : vector<2x128xf32>
    %191 = vector.extract_strided_slice %184 {offsets = [0, 128], sizes = [2, 128], strides = [1, 1]} : vector<2x512xf32> to vector<2x128xf32>
    %192 = arith.negf %191 : vector<2x128xf32>
    %193 = math.exp %192 : vector<2x128xf32>
    %cst_88 = arith.constant 1.000000e+00 : f32
    %194 = vector.broadcast %cst_88 : f32 to vector<2x128xf32>
    %195 = arith.addf %194, %193 : vector<2x128xf32>
    %196 = arith.divf %194, %195 : vector<2x128xf32>
    %197 = vector.extract_strided_slice %184 {offsets = [0, 256], sizes = [2, 128], strides = [1, 1]} : vector<2x512xf32> to vector<2x128xf32>
    %198 = math.tanh %197 : vector<2x128xf32>
    %199 = vector.extract_strided_slice %184 {offsets = [0, 384], sizes = [2, 128], strides = [1, 1]} : vector<2x512xf32> to vector<2x128xf32>
    %200 = arith.negf %199 : vector<2x128xf32>
    %201 = math.exp %200 : vector<2x128xf32>
    %cst_89 = arith.constant 1.000000e+00 : f32
    %202 = vector.broadcast %cst_89 : f32 to vector<2x128xf32>
    %203 = arith.addf %202, %201 : vector<2x128xf32>
    %204 = arith.divf %202, %203 : vector<2x128xf32>
    %c0_90 = arith.constant 0 : index
    %c0_91 = arith.constant 0 : index
    %205 = vector.load %arg8[%c0_90, %c0_91] : memref<2x128xf32, #tpu.memory_space<vmem>>, vector<2x128xf32>
    %206 = arith.mulf %196, %205 : vector<2x128xf32>
    %207 = arith.mulf %190, %198 : vector<2x128xf32>
    %208 = arith.addf %206, %207 : vector<2x128xf32>
    %c0_92 = arith.constant 0 : index
    %c0_93 = arith.constant 0 : index
    %209 = vector.load %arg8[%c0_92, %c0_93] : memref<2x128xf32, #tpu.memory_space<vmem>>, vector<2x128xf32>
    tpu.vector_store %arg8[%c0_92, %c0_93], %208 {strides = array<i32>} : memref<2x128xf32, #tpu.memory_space<vmem>>, vector<2x128xf32>,
    %210 = math.tanh %208 : vector<2x128xf32>
    %211 = arith.mulf %204, %210 : vector<2x128xf32>
    %c0_94 = arith.constant 0 : index
    %c0_95 = arith.constant 0 : index
    %212 = vector.load %arg7[%c0_94, %c0_95] : memref<2x128xf32, #tpu.memory_space<vmem>>, vector<2x128xf32>
    tpu.vector_store %arg7[%c0_94, %c0_95], %211 {strides = array<i32>} : memref<2x128xf32, #tpu.memory_space<vmem>>, vector<2x128xf32>,
    %c6_i32 = arith.constant 6 : i32
    %213 = arith.index_cast %c6_i32 : i32 to index
    %c0_96 = arith.constant 0 : index
    %c0_97 = arith.constant 0 : index
    %214 = vector.load %arg2[%213, %c0_96, %c0_97] : memref<8x2x512xf32, #tpu.memory_space<vmem>>, vector<1x2x512xf32>
    %215 = vector.shape_cast %214 : vector<1x2x512xf32> to vector<2x512xf32>
    %c0_98 = arith.constant 0 : index
    %c0_99 = arith.constant 0 : index
    %216 = vector.load %arg7[%c0_98, %c0_99] : memref<2x128xf32, #tpu.memory_space<vmem>>, vector<2x128xf32>
    %c0_100 = arith.constant 0 : index
    %c0_101 = arith.constant 0 : index
    %217 = vector.load %arg3[%c0_100, %c0_101] : memref<128x512xf32, #tpu.memory_space<vmem>>, vector<128x512xf32>
    %cst_102 = arith.constant dense<0.000000e+00> : vector<2x512xf32>
    %218 = tpu.matmul %216, %217, %cst_102 {dimension_numbers = #tpu.dot_dimension_numbers<[1], [0], [0], [1], [0, 0, 1, 1], [], []>} : vector<2x128xf32>, vector<128x512xf32>, vector<2x512xf32> -> vector<2x512xf32>
    %219 = arith.addf %215, %218 : vector<2x512xf32>
    %220 = vector.extract_strided_slice %219 {offsets = [0, 0], sizes = [2, 128], strides = [1, 1]} : vector<2x512xf32> to vector<2x128xf32>
    %221 = arith.negf %220 : vector<2x128xf32>
    %222 = math.exp %221 : vector<2x128xf32>
    %cst_103 = arith.constant 1.000000e+00 : f32
    %223 = vector.broadcast %cst_103 : f32 to vector<2x128xf32>
    %224 = arith.addf %223, %222 : vector<2x128xf32>
    %225 = arith.divf %223, %224 : vector<2x128xf32>
    %226 = vector.extract_strided_slice %219 {offsets = [0, 128], sizes = [2, 128], strides = [1, 1]} : vector<2x512xf32> to vector<2x128xf32>
    %227 = arith.negf %226 : vector<2x128xf32>
    %228 = math.exp %227 : vector<2x128xf32>
    %cst_104 = arith.constant 1.000000e+00 : f32
    %229 = vector.broadcast %cst_104 : f32 to vector<2x128xf32>
    %230 = arith.addf %229, %228 : vector<2x128xf32>
    %231 = arith.divf %229, %230 : vector<2x128xf32>
    %232 = vector.extract_strided_slice %219 {offsets = [0, 256], sizes = [2, 128], strides = [1, 1]} : vector<2x512xf32> to vector<2x128xf32>
    %233 = math.tanh %232 : vector<2x128xf32>
    %234 = vector.extract_strided_slice %219 {offsets = [0, 384], sizes = [2, 128], strides = [1, 1]} : vector<2x512xf32> to vector<2x128xf32>
    %235 = arith.negf %234 : vector<2x128xf32>
    %236 = math.exp %235 : vector<2x128xf32>
    %cst_105 = arith.constant 1.000000e+00 : f32
    %237 = vector.broadcast %cst_105 : f32 to vector<2x128xf32>
    %238 = arith.addf %237, %236 : vector<2x128xf32>
    %239 = arith.divf %237, %238 : vector<2x128xf32>
    %c0_106 = arith.constant 0 : index
    %c0_107 = arith.constant 0 : index
    %240 = vector.load %arg8[%c0_106, %c0_107] : memref<2x128xf32, #tpu.memory_space<vmem>>, vector<2x128xf32>
    %241 = arith.mulf %231, %240 : vector<2x128xf32>
    %242 = arith.mulf %225, %233 : vector<2x128xf32>
    %243 = arith.addf %241, %242 : vector<2x128xf32>
    %c0_108 = arith.constant 0 : index
    %c0_109 = arith.constant 0 : index
    %244 = vector.load %arg8[%c0_108, %c0_109] : memref<2x128xf32, #tpu.memory_space<vmem>>, vector<2x128xf32>
    tpu.vector_store %arg8[%c0_108, %c0_109], %243 {strides = array<i32>} : memref<2x128xf32, #tpu.memory_space<vmem>>, vector<2x128xf32>,
    %245 = math.tanh %243 : vector<2x128xf32>
    %246 = arith.mulf %239, %245 : vector<2x128xf32>
    %c0_110 = arith.constant 0 : index
    %c0_111 = arith.constant 0 : index
    %247 = vector.load %arg7[%c0_110, %c0_111] : memref<2x128xf32, #tpu.memory_space<vmem>>, vector<2x128xf32>
    tpu.vector_store %arg7[%c0_110, %c0_111], %246 {strides = array<i32>} : memref<2x128xf32, #tpu.memory_space<vmem>>, vector<2x128xf32>,
    %c7_i32 = arith.constant 7 : i32
    %248 = arith.index_cast %c7_i32 : i32 to index
    %c0_112 = arith.constant 0 : index
    %c0_113 = arith.constant 0 : index
    %249 = vector.load %arg2[%248, %c0_112, %c0_113] : memref<8x2x512xf32, #tpu.memory_space<vmem>>, vector<1x2x512xf32>
    %250 = vector.shape_cast %249 : vector<1x2x512xf32> to vector<2x512xf32>
    %c0_114 = arith.constant 0 : index
    %c0_115 = arith.constant 0 : index
    %251 = vector.load %arg7[%c0_114, %c0_115] : memref<2x128xf32, #tpu.memory_space<vmem>>, vector<2x128xf32>
    %c0_116 = arith.constant 0 : index
    %c0_117 = arith.constant 0 : index
    %252 = vector.load %arg3[%c0_116, %c0_117] : memref<128x512xf32, #tpu.memory_space<vmem>>, vector<128x512xf32>
    %cst_118 = arith.constant dense<0.000000e+00> : vector<2x512xf32>
    %253 = tpu.matmul %251, %252, %cst_118 {dimension_numbers = #tpu.dot_dimension_numbers<[1], [0], [0], [1], [0, 0, 1, 1], [], []>} : vector<2x128xf32>, vector<128x512xf32>, vector<2x512xf32> -> vector<2x512xf32>
    %254 = arith.addf %250, %253 : vector<2x512xf32>
    %255 = vector.extract_strided_slice %254 {offsets = [0, 0], sizes = [2, 128], strides = [1, 1]} : vector<2x512xf32> to vector<2x128xf32>
    %256 = arith.negf %255 : vector<2x128xf32>
    %257 = math.exp %256 : vector<2x128xf32>
    %cst_119 = arith.constant 1.000000e+00 : f32
    %258 = vector.broadcast %cst_119 : f32 to vector<2x128xf32>
    %259 = arith.addf %258, %257 : vector<2x128xf32>
    %260 = arith.divf %258, %259 : vector<2x128xf32>
    %261 = vector.extract_strided_slice %254 {offsets = [0, 128], sizes = [2, 128], strides = [1, 1]} : vector<2x512xf32> to vector<2x128xf32>
    %262 = arith.negf %261 : vector<2x128xf32>
    %263 = math.exp %262 : vector<2x128xf32>
    %cst_120 = arith.constant 1.000000e+00 : f32
    %264 = vector.broadcast %cst_120 : f32 to vector<2x128xf32>
    %265 = arith.addf %264, %263 : vector<2x128xf32>
    %266 = arith.divf %264, %265 : vector<2x128xf32>
    %267 = vector.extract_strided_slice %254 {offsets = [0, 256], sizes = [2, 128], strides = [1, 1]} : vector<2x512xf32> to vector<2x128xf32>
    %268 = math.tanh %267 : vector<2x128xf32>
    %269 = vector.extract_strided_slice %254 {offsets = [0, 384], sizes = [2, 128], strides = [1, 1]} : vector<2x512xf32> to vector<2x128xf32>
    %270 = arith.negf %269 : vector<2x128xf32>
    %271 = math.exp %270 : vector<2x128xf32>
    %cst_121 = arith.constant 1.000000e+00 : f32
    %272 = vector.broadcast %cst_121 : f32 to vector<2x128xf32>
    %273 = arith.addf %272, %271 : vector<2x128xf32>
    %274 = arith.divf %272, %273 : vector<2x128xf32>
    %c0_122 = arith.constant 0 : index
    %c0_123 = arith.constant 0 : index
    %275 = vector.load %arg8[%c0_122, %c0_123] : memref<2x128xf32, #tpu.memory_space<vmem>>, vector<2x128xf32>
    %276 = arith.mulf %266, %275 : vector<2x128xf32>
    %277 = arith.mulf %260, %268 : vector<2x128xf32>
    %278 = arith.addf %276, %277 : vector<2x128xf32>
    %c0_124 = arith.constant 0 : index
    %c0_125 = arith.constant 0 : index
    %279 = vector.load %arg8[%c0_124, %c0_125] : memref<2x128xf32, #tpu.memory_space<vmem>>, vector<2x128xf32>
    tpu.vector_store %arg8[%c0_124, %c0_125], %278 {strides = array<i32>} : memref<2x128xf32, #tpu.memory_space<vmem>>, vector<2x128xf32>,
    %280 = math.tanh %278 : vector<2x128xf32>
    %281 = arith.mulf %274, %280 : vector<2x128xf32>
    %c0_126 = arith.constant 0 : index
    %c0_127 = arith.constant 0 : index
    %282 = vector.load %arg7[%c0_126, %c0_127] : memref<2x128xf32, #tpu.memory_space<vmem>>, vector<2x128xf32>
    tpu.vector_store %arg7[%c0_126, %c0_127], %281 {strides = array<i32>} : memref<2x128xf32, #tpu.memory_space<vmem>>, vector<2x128xf32>,
    %c8_i32 = arith.constant 8 : i32
    %c0_i32_128 = arith.constant 0 : i32
    %283 = arith.cmpi eq, %arg1, %c0_i32_128 : i32
    %284 = arith.extui %283 : i1 to i32
    %c0_i32_129 = arith.constant 0 : i32
    %285 = arith.cmpi ne, %284, %c0_i32_129 : i32
    scf.if %285 {
      %c0_130 = arith.constant 0 : index
      %c0_131 = arith.constant 0 : index
      %286 = vector.load %arg7[%c0_130, %c0_131] : memref<2x128xf32, #tpu.memory_space<vmem>>, vector<2x128xf32>
      %c0_132 = arith.constant 0 : index
      %c0_133 = arith.constant 0 : index
      %287 = vector.load %arg4[%c0_132, %c0_133] : memref<128x128xf32, #tpu.memory_space<vmem>>, vector<128x128xf32>
      %cst_134 = arith.constant dense<0.000000e+00> : vector<2x128xf32>
      %288 = tpu.matmul %286, %287, %cst_134 {dimension_numbers = #tpu.dot_dimension_numbers<[1], [0], [0], [1], [0, 0, 1, 1], [], []>} : vector<2x128xf32>, vector<128x128xf32>, vector<2x128xf32> -> vector<2x128xf32>
      %c0_135 = arith.constant 0 : index
      %c0_136 = arith.constant 0 : index
      %289 = vector.load %arg5[%c0_135, %c0_136] : memref<1x128xf32, #tpu.memory_space<vmem>>, vector<1x128xf32>
      %290 = vector.broadcast %289 : vector<1x128xf32> to vector<2x128xf32>
      %291 = arith.addf %288, %290 : vector<2x128xf32>
      %c0_137 = arith.constant 0 : index
      %c0_138 = arith.constant 0 : index
      %292 = vector.load %arg6[%c0_137, %c0_138] : memref<2x128xf32, #tpu.memory_space<vmem>>, vector<2x128xf32>
      tpu.vector_store %arg6[%c0_137, %c0_138], %291 {strides = array<i32>} : memref<2x128xf32, #tpu.memory_space<vmem>>, vector<2x128xf32>,
    } else {
    }
    return
  }
  func.func @transform_0(%arg0: i32, %arg1: i32) -> (i32, i32, i32) {
    %c0_i32 = arith.constant 0 : i32
    %c0_i32_0 = arith.constant 0 : i32
    return %arg1, %arg0, %c0_i32 : i32, i32, i32
  }
  func.func @transform_1(%arg0: i32, %arg1: i32) -> (i32, i32) {
    %c0_i32 = arith.constant 0 : i32
    %c0_i32_0 = arith.constant 0 : i32
    %c0_i32_1 = arith.constant 0 : i32
    return %c0_i32, %c0_i32_0 : i32, i32
  }
  func.func @transform_2(%arg0: i32, %arg1: i32) -> (i32, i32) {
    %c0_i32 = arith.constant 0 : i32
    %c0_i32_0 = arith.constant 0 : i32
    %c0_i32_1 = arith.constant 0 : i32
    return %c0_i32, %c0_i32_0 : i32, i32
  }
  func.func @transform_3(%arg0: i32, %arg1: i32) -> (i32, i32) {
    %c0_i32 = arith.constant 0 : i32
    %c0_i32_0 = arith.constant 0 : i32
    %c0_i32_1 = arith.constant 0 : i32
    return %c0_i32, %c0_i32_0 : i32, i32
  }
  func.func @transform_4(%arg0: i32, %arg1: i32) -> (i32, i32) {
    %c0_i32 = arith.constant 0 : i32
    %c0_i32_0 = arith.constant 0 : i32
    return %arg0, %c0_i32 : i32, i32
  }
}

</mosaic_0001>

<llo_original>
// kernel: fixed_demo_net_simple.1
$region0: #{fixed_demo_net_simple.1}
  #allocation0 [shape = 'u32[]', space=smem, size = 0x4, offset = 0x4, fixed_abs, tag = 'smem constant byte address 0x4 - core index']
  #allocation1 [shape = 'u32[72,128]{1,0:T(1,128)}', space=vmem, size = 0x9000, scoped, tag = 'internal scratch']
  #allocation2 [shape = 'f32[2,128]{1,0:T(2,128)}', space=vmem, size = 0x400, scoped, tag = 'scratch operand']
  #allocation3 [shape = 'f32[2,128]{1,0:T(2,128)}', space=vmem, size = 0x400, scoped, tag = 'scratch operand']
  %s0 = inlined_call_operand.vmem [shape: f32[8,2,512], index: 0, kind: input, shape index: {}]
  %s1 = inlined_call_operand.hbm [shape: f32[128,512], index: 1, kind: input, shape index: {}]
  %s2 = inlined_call_operand.hbm [shape: f32[128,128], index: 2, kind: input, shape index: {}]
  %s3 = inlined_call_operand.hbm [shape: f32[1,128], index: 3, kind: input, shape index: {}]
  %s4 = inlined_call_operand.hbm [shape: f32[2,128], index: 4, kind: output, shape index: {}]
  %s5 = sld [smem:[#allocation0]]
  $region46: #{fixed_demo_net_simple.1} parent=0
    _
  %s7 = ssub.s32 1, %s5
  %s8 = scalar_select 0, %s7, %s5
  $region1: #{fixed_demo_net_simple.1} parent=0
    #allocation4 [shape = 'u8[262144]{0}', space=vmem, size = 0x40000, scoped, tag = 'input window, operand 1, single buffered']
    #allocation5 [shape = 's32[1]{0}', space=sflag, size = 0x4, scoped, tag = 'scoped memory for fixed_demo_net_simple.1']
    #allocation6 [shape = 's32[1]{0}', space=sflag, size = 0x4, scoped, tag = 'scoped memory for fixed_demo_net_simple.1']
    #allocation7 [shape = 'u8[65536]{0}', space=vmem, size = 0x10000, scoped, tag = 'input window, operand 2, single buffered']
    #allocation8 [shape = 's32[1]{0}', space=sflag, size = 0x4, scoped, tag = 'scoped memory for fixed_demo_net_simple.1']
    #allocation9 [shape = 'u8[512]{0}', space=vmem, size = 0x400, scoped, tag = 'input window, operand 3, single buffered']
    #allocation10 [shape = 'u8[1024]{0}', space=vmem, size = 0x400, scoped, tag = 'output window, operand 0, single buffered']
    %9 = vsyncpa [#allocation5], 0
    %10 = vsyncpa [#allocation8], 0
    %11 = vsyncpa [#allocation6], 0
    // Predicated region
    $region2: #{fixed_demo_net_simple.1} parent=1 // pred_check
      _
    $region3: #{fixed_demo_net_simple.1} parent=1 // pred_check_branch
      %13 = sbr.rel (0) target = $region5
    $region4: #{fixed_demo_net_simple.1} parent=1 // pred_region
      _
    $region5: #{fixed_demo_net_simple.1} parent=1 // pred_fallthru
      _
    // Predicated region
    $region6: #{fixed_demo_net_simple.1} parent=1 // pred_check
      _
    $region7: #{fixed_demo_net_simple.1} parent=1 // pred_check_branch
      %15 = sbr.rel (0) target = $region9
    $region8: #{fixed_demo_net_simple.1} parent=1 // pred_region
      %17 = vsyncadd [#allocation5], 0
      %s18 = sshll.u32 %s1, 4
      %s19 = int_to_ptr.hbm [resolvable:$true] %s18
      %s20 = sshll.u32 [#allocation4], 4
      %s21 = int_to_ptr.vmem [resolvable:$true] %s20
      %26 = dma.hbm_to_vmem [thread:$0]  %s19, 8192, %s21, [#allocation5], 512, 512, 32
    $region9: #{fixed_demo_net_simple.1} parent=1 // pred_fallthru
      _
    // Predicated region
    $region10: #{fixed_demo_net_simple.1} parent=1 // pred_check
      _
    $region11: #{fixed_demo_net_simple.1} parent=1 // pred_check_branch
      %28 = sbr.rel (0) target = $region13
    $region12: #{fixed_demo_net_simple.1} parent=1 // pred_region
      %30 = vsyncadd [#allocation8], 0
      %s31 = sshll.u32 %s2, 4
      %s32 = int_to_ptr.hbm [resolvable:$true] %s31
      %s33 = sshll.u32 [#allocation7], 4
      %s34 = int_to_ptr.vmem [resolvable:$true] %s33
      %39 = dma.hbm_to_vmem [thread:$0]  %s32, 2048, %s34, [#allocation8], 128, 128, 8
    $region13: #{fixed_demo_net_simple.1} parent=1 // pred_fallthru
      _
    // Predicated region
    $region14: #{fixed_demo_net_simple.1} parent=1 // pred_check
      _
    $region15: #{fixed_demo_net_simple.1} parent=1 // pred_check_branch
      %41 = sbr.rel (0) target = $region17
    $region16: #{fixed_demo_net_simple.1} parent=1 // pred_region
      %43 = vsyncadd [#allocation8], 0
      %s45 = sshll.u32 %s3, 4
      %s46 = int_to_ptr.hbm [resolvable:$true] %s45
      %s47 = sshll.u32 [#allocation9], 4
      %s48 = int_to_ptr.vmem [resolvable:$true] %s47
      %50 = dma.hbm_to_vmem [thread:$0]  %s46, 16, %s48, [#allocation8]
    $region17: #{fixed_demo_net_simple.1} parent=1 // pred_fallthru
      _
    // Predicated region
    $region18: #{fixed_demo_net_simple.1} parent=1 // pred_check
      _
    $region19: #{fixed_demo_net_simple.1} parent=1 // pred_check_branch
      %52 = sbr.rel (0) target = $region21
    $region20: #{fixed_demo_net_simple.1} parent=1 // pred_region
      %54 = dma.done [#allocation5], 8192
    $region21: #{fixed_demo_net_simple.1} parent=1 // pred_fallthru
      _
    // Predicated region
    $region22: #{fixed_demo_net_simple.1} parent=1 // pred_check
      _
    $region23: #{fixed_demo_net_simple.1} parent=1 // pred_check_branch
      %56 = sbr.rel (0) target = $region25
    $region24: #{fixed_demo_net_simple.1} parent=1 // pred_region
      %58 = dma.done [#allocation8], 2048
    $region25: #{fixed_demo_net_simple.1} parent=1 // pred_fallthru
      _
    // Predicated region
    $region26: #{fixed_demo_net_simple.1} parent=1 // pred_check
      _
    $region27: #{fixed_demo_net_simple.1} parent=1 // pred_check_branch
      %60 = sbr.rel (0) target = $region29
    $region28: #{fixed_demo_net_simple.1} parent=1 // pred_region
      %62 = dma.done [#allocation8], 16
    $region29: #{fixed_demo_net_simple.1} parent=1 // pred_fallthru
      _
    %p63 = scmp.eq.s32.totalorder 0, 0
    // Predicated region
    $region30: #{fixed_demo_net_simple.1} parent=1 // pred_check
      %p64 = pneg %p63
    $region31: #{fixed_demo_net_simple.1} parent=1 // pred_check_branch
      %66 = sbr.rel (%p64) target = $region33
    $region32: #{fixed_demo_net_simple.1} parent=1 // pred_region
      %67 = vst [vmem:[#allocation2] sm:$0x3] 0.0
      %68 = vst [vmem:[#allocation3] sm:$0x3] 0.0
    $region33: #{fixed_demo_net_simple.1} parent=1 // pred_fallthru
      _
    %v69 = vld [vmem:[%s0] sm:$0xff]
    %v70 = vld [vmem:[#allocation2] sm:$0x3]
    %v71 = vld [vmem:[#allocation4] sm:$0xff]
    %v72 = vld [vmem:[#allocation4 + $0x8] sm:$0xff]
    %v73 = vld [vmem:[#allocation4 + $0x10] sm:$0xff]
    %v74 = vld [vmem:[#allocation4 + $0x18] sm:$0xff]
    %v75 = vld [vmem:[#allocation4 + $0x20] sm:$0xff]
    %v76 = vld [vmem:[#allocation4 + $0x28] sm:$0xff]
    %v77 = vld [vmem:[#allocation4 + $0x30] sm:$0xff]
    %v78 = vld [vmem:[#allocation4 + $0x38] sm:$0xff]
    %v79 = vld [vmem:[#allocation4 + $0x40] sm:$0xff]
    %v80 = vld [vmem:[#allocation4 + $0x48] sm:$0xff]
    %v81 = vld [vmem:[#allocation4 + $0x50] sm:$0xff]
    %v82 = vld [vmem:[#allocation4 + $0x58] sm:$0xff]
    %v83 = vld [vmem:[#allocation4 + $0x60] sm:$0xff]
    %v84 = vld [vmem:[#allocation4 + $0x68] sm:$0xff]
    %v85 = vld [vmem:[#allocation4 + $0x70] sm:$0xff]
    %v86 = vld [vmem:[#allocation4 + $0x78] sm:$0xff]
    %v87 = vld [vmem:[#allocation4 + $0x80] sm:$0xff]
    %v88 = vld [vmem:[#allocation4 + $0x88] sm:$0xff]
    %v89 = vld [vmem:[#allocation4 + $0x90] sm:$0xff]
    %v90 = vld [vmem:[#allocation4 + $0x98] sm:$0xff]
    %v91 = vld [vmem:[#allocation4 + $0xa0] sm:$0xff]
    %v92 = vld [vmem:[#allocation4 + $0xa8] sm:$0xff]
    %v93 = vld [vmem:[#allocation4 + $0xb0] sm:$0xff]
    %v94 = vld [vmem:[#allocation4 + $0xb8] sm:$0xff]
    %v95 = vld [vmem:[#allocation4 + $0xc0] sm:$0xff]
    %v96 = vld [vmem:[#allocation4 + $0xc8] sm:$0xff]
    %v97 = vld [vmem:[#allocation4 + $0xd0] sm:$0xff]
    %v98 = vld [vmem:[#allocation4 + $0xd8] sm:$0xff]
    %v99 = vld [vmem:[#allocation4 + $0xe0] sm:$0xff]
    %v100 = vld [vmem:[#allocation4 + $0xe8] sm:$0xff]
    %v101 = vld [vmem:[#allocation4 + $0xf0] sm:$0xff]
    %v102 = vld [vmem:[#allocation4 + $0xf8] sm:$0xff]
    %v103 = vld [vmem:[#allocation4 + $0x100] sm:$0xff]
    %v104 = vld [vmem:[#allocation4 + $0x108] sm:$0xff]
    %v105 = vld [vmem:[#allocation4 + $0x110] sm:$0xff]
    %v106 = vld [vmem:[#allocation4 + $0x118] sm:$0xff]
    %v107 = vld [vmem:[#allocation4 + $0x120] sm:$0xff]
    %v108 = vld [vmem:[#allocation4 + $0x128] sm:$0xff]
    %v109 = vld [vmem:[#allocation4 + $0x130] sm:$0xff]
    %v110 = vld [vmem:[#allocation4 + $0x138] sm:$0xff]
    %v111 = vld [vmem:[#allocation4 + $0x140] sm:$0xff]
    %v112 = vld [vmem:[#allocation4 + $0x148] sm:$0xff]
    %v113 = vld [vmem:[#allocation4 + $0x150] sm:$0xff]
    %v114 = vld [vmem:[#allocation4 + $0x158] sm:$0xff]
    %v115 = vld [vmem:[#allocation4 + $0x160] sm:$0xff]
    %v116 = vld [vmem:[#allocation4 + $0x168] sm:$0xff]
    %v117 = vld [vmem:[#allocation4 + $0x170] sm:$0xff]
    %v118 = vld [vmem:[#allocation4 + $0x178] sm:$0xff]
    %v119 = vld [vmem:[#allocation4 + $0x180] sm:$0xff]
    %v120 = vld [vmem:[#allocation4 + $0x188] sm:$0xff]
    %v121 = vld [vmem:[#allocation4 + $0x190] sm:$0xff]
    %v122 = vld [vmem:[#allocation4 + $0x198] sm:$0xff]
    %v123 = vld [vmem:[#allocation4 + $0x1a0] sm:$0xff]
    %v124 = vld [vmem:[#allocation4 + $0x1a8] sm:$0xff]
    %v125 = vld [vmem:[#allocation4 + $0x1b0] sm:$0xff]
    %v126 = vld [vmem:[#allocation4 + $0x1b8] sm:$0xff]
    %v127 = vld [vmem:[#allocation4 + $0x1c0] sm:$0xff]
    %v128 = vld [vmem:[#allocation4 + $0x1c8] sm:$0xff]
    %v129 = vld [vmem:[#allocation4 + $0x1d0] sm:$0xff]
    %v130 = vld [vmem:[#allocation4 + $0x1d8] sm:$0xff]
    %v131 = vld [vmem:[#allocation4 + $0x1e0] sm:$0xff]
    %v132 = vld [vmem:[#allocation4 + $0x1e8] sm:$0xff]
    %v133 = vld [vmem:[#allocation4 + $0x1f0] sm:$0xff]
    %v134 = vld [vmem:[#allocation4 + $0x1f8] sm:$0xff]
    %135 = vmatpush.msra.mxu0 %v131
    %136 = vmatpush.msra.mxu0 %v127
    %137 = vmatpush.msra.mxu0 %v123
    %138 = vmatpush.msra.mxu0 %v119
    %139 = vmatpush.msra.mxu0 %v115
    %140 = vmatpush.msra.mxu0 %v111
    %141 = vmatpush.msra.mxu0 %v107
    %142 = vmatpush.msra.mxu0 %v103
    %143 = vmatpush.msra.mxu0 %v99
    %144 = vmatpush.msra.mxu0 %v95
    %145 = vmatpush.msra.mxu0 %v91
    %146 = vmatpush.msra.mxu0 %v87
    %147 = vmatpush.msra.mxu0 %v83
    %148 = vmatpush.msra.mxu0 %v79
    %149 = vmatpush.msra.mxu0 %v75
    %150 = vmatpush.msra.mxu0 %v71
    %151 = vmatmul.f32.gmra.mxu0 %v70
    %v152 = vpop.f32.mrf.mxu0
    %v153 = vadd.f32 0.0, %v152
    %154 = vdwg.mxu0
    %155 = vmatpush.msra.mxu0 %v132
    %156 = vmatpush.msra.mxu0 %v128
    %157 = vmatpush.msra.mxu0 %v124
    %158 = vmatpush.msra.mxu0 %v120
    %159 = vmatpush.msra.mxu0 %v116
    %160 = vmatpush.msra.mxu0 %v112
    %161 = vmatpush.msra.mxu0 %v108
    %162 = vmatpush.msra.mxu0 %v104
    %163 = vmatpush.msra.mxu0 %v100
    %164 = vmatpush.msra.mxu0 %v96
    %165 = vmatpush.msra.mxu0 %v92
    %166 = vmatpush.msra.mxu0 %v88
    %167 = vmatpush.msra.mxu0 %v84
    %168 = vmatpush.msra.mxu0 %v80
    %169 = vmatpush.msra.mxu0 %v76
    %170 = vmatpush.msra.mxu0 %v72
    %171 = vmatmul.f32.gmra.mxu0 %v70
    %v172 = vpop.f32.mrf.mxu0
    %v173 = vadd.f32 0.0, %v172
    %174 = vdwg.mxu0
    %175 = vmatpush.msra.mxu0 %v133
    %176 = vmatpush.msra.mxu0 %v129
    %177 = vmatpush.msra.mxu0 %v125
    %178 = vmatpush.msra.mxu0 %v121
    %179 = vmatpush.msra.mxu0 %v117
    %180 = vmatpush.msra.mxu0 %v113
    %181 = vmatpush.msra.mxu0 %v109
    %182 = vmatpush.msra.mxu0 %v105
    %183 = vmatpush.msra.mxu0 %v101
    %184 = vmatpush.msra.mxu0 %v97
    %185 = vmatpush.msra.mxu0 %v93
    %186 = vmatpush.msra.mxu0 %v89
    %187 = vmatpush.msra.mxu0 %v85
    %188 = vmatpush.msra.mxu0 %v81
    %189 = vmatpush.msra.mxu0 %v77
    %190 = vmatpush.msra.mxu0 %v73
    %191 = vmatmul.f32.gmra.mxu0 %v70
    %v192 = vpop.f32.mrf.mxu0
    %v193 = vadd.f32 0.0, %v192
    %194 = vdwg.mxu0
    %195 = vmatpush.msra.mxu0 %v134
    %196 = vmatpush.msra.mxu0 %v130
    %197 = vmatpush.msra.mxu0 %v126
    %198 = vmatpush.msra.mxu0 %v122
    %199 = vmatpush.msra.mxu0 %v118
    %200 = vmatpush.msra.mxu0 %v114
    %201 = vmatpush.msra.mxu0 %v110
    %202 = vmatpush.msra.mxu0 %v106
    %203 = vmatpush.msra.mxu0 %v102
    %204 = vmatpush.msra.mxu0 %v98
    %205 = vmatpush.msra.mxu0 %v94
    %206 = vmatpush.msra.mxu0 %v90
    %207 = vmatpush.msra.mxu0 %v86
    %208 = vmatpush.msra.mxu0 %v82
    %209 = vmatpush.msra.mxu0 %v78
    %210 = vmatpush.msra.mxu0 %v74
    %211 = vmatmul.f32.gmra.mxu0 %v70
    %v212 = vpop.f32.mrf.mxu0
    %v213 = vadd.f32 0.0, %v212
    %214 = vdwg.mxu0
    %v219 = vrot.slane %v173, 6
    %v220 = vrot.slane %v193, 4
    %v221 = vrot.slane %v213, 2
    %vm222 = vcmask 1041408
    %v223 = vsel %vm222, %v153, %v219
    %vm224 = vcmask 1045508
    %v225 = vsel %vm224, %v220, %v221
    %vm226 = vcmask 1043456
    %v227 = vsel %vm226, %v223, %v225
    %v229 = vadd.f32 %v69, %v227
    %v230 = vxor.u32 %v229, 2147483648
    %v231 = vmul.f32 %v230, 1.442695
    %v232 = vpow.pop %v231
    %v233 = vadd.f32 %v232, 1.0
    %v234 = vrcp.pop %v233
    %v235 = vmul.f32 %v233, %v234
    %v236 = vsub.f32 1.0, %v235
    %v237 = vmul.f32 %v234, %v236
    %v238 = vadd.f32 %v234, %v237
    %vm239 = vweird.f32 %v233
    %vm240 = vweird.f32 %v234
    %vm241 = vmor %vm239, %vm240
    %v242 = vsel %vm241, %v234, %v238
    %v243 = vand.u32 2147483647, %v233
    %vm244 = vcmp.eq.f32.partialorder %v243, 8.507059e+37
    %v245 = vand.u32 %v233, 2147483648
    %v246 = vor.u32 1.1754944e-38, %v245
    %v247 = vsel %vm244, %v246, %v242
    %v248 = vmul.f32 1.0, %v247
    %v250 = vrot.slane %v229, 2
    %v252 = vxor.u32 %v250, 2147483648
    %v253 = vmul.f32 %v252, 1.442695
    %v254 = vpow.pop %v253
    %v255 = vadd.f32 %v254, 1.0
    %v256 = vrcp.pop %v255
    %v257 = vmul.f32 %v255, %v256
    %v258 = vsub.f32 1.0, %v257
    %v259 = vmul.f32 %v256, %v258
    %v260 = vadd.f32 %v256, %v259
    %vm261 = vweird.f32 %v255
    %vm262 = vweird.f32 %v256
    %vm263 = vmor %vm261, %vm262
    %v264 = vsel %vm263, %v256, %v260
    %v265 = vand.u32 2147483647, %v255
    %vm266 = vcmp.eq.f32.partialorder %v265, 8.507059e+37
    %v267 = vand.u32 %v255, 2147483648
    %v268 = vor.u32 1.1754944e-38, %v267
    %v269 = vsel %vm266, %v268, %v264
    %v270 = vmul.f32 1.0, %v269
    %v271 = vrot.slane %v229, 4
    %v273 = vtanh.pop %v271
    %v274 = vrot.slane %v229, 6
    %v276 = vxor.u32 %v274, 2147483648
    %v277 = vmul.f32 %v276, 1.442695
    %v278 = vpow.pop %v277
    %v279 = vadd.f32 %v278, 1.0
    %v280 = vrcp.pop %v279
    %v281 = vmul.f32 %v279, %v280
    %v282 = vsub.f32 1.0, %v281
    %v283 = vmul.f32 %v280, %v282
    %v284 = vadd.f32 %v280, %v283
    %vm285 = vweird.f32 %v279
    %vm286 = vweird.f32 %v280
    %vm287 = vmor %vm285, %vm286
    %v288 = vsel %vm287, %v280, %v284
    %v289 = vand.u32 2147483647, %v279
    %vm290 = vcmp.eq.f32.partialorder %v289, 8.507059e+37
    %v291 = vand.u32 %v279, 2147483648
    %v292 = vor.u32 1.1754944e-38, %v291
    %v293 = vsel %vm290, %v292, %v288
    %v294 = vmul.f32 1.0, %v293
    %v295 = vld [vmem:[#allocation3] sm:$0x3]
    %v296 = vmul.f32 %v270, %v295
    %v297 = vmul.f32 %v248, %v273
    %v298 = vadd.f32 %v296, %v297
    %299 = vst [vmem:[#allocation3] sm:$0x3] %v298
    %v300 = vtanh.pop %v298
    %v301 = vmul.f32 %v294, %v300
    %302 = vst [vmem:[#allocation2] sm:$0x3] %v301
    %s303 = scalar_lea.vmem %s0, 8
    %v304 = vld [vmem:[%s303] sm:$0xff]
    %v305 = vld [vmem:[#allocation2] sm:$0x3]
    %v306 = vld [vmem:[#allocation4] sm:$0xff]
    %v307 = vld [vmem:[#allocation4 + $0x8] sm:$0xff]
    %v308 = vld [vmem:[#allocation4 + $0x10] sm:$0xff]
    %v309 = vld [vmem:[#allocation4 + $0x18] sm:$0xff]
    %v310 = vld [vmem:[#allocation4 + $0x20] sm:$0xff]
    %v311 = vld [vmem:[#allocation4 + $0x28] sm:$0xff]
    %v312 = vld [vmem:[#allocation4 + $0x30] sm:$0xff]
    %v313 = vld [vmem:[#allocation4 + $0x38] sm:$0xff]
    %v314 = vld [vmem:[#allocation4 + $0x40] sm:$0xff]
    %v315 = vld [vmem:[#allocation4 + $0x48] sm:$0xff]
    %v316 = vld [vmem:[#allocation4 + $0x50] sm:$0xff]
    %v317 = vld [vmem:[#allocation4 + $0x58] sm:$0xff]
    %v318 = vld [vmem:[#allocation4 + $0x60] sm:$0xff]
    %v319 = vld [vmem:[#allocation4 + $0x68] sm:$0xff]
    %v320 = vld [vmem:[#allocation4 + $0x70] sm:$0xff]
    %v321 = vld [vmem:[#allocation4 + $0x78] sm:$0xff]
    %v322 = vld [vmem:[#allocation4 + $0x80] sm:$0xff]
    %v323 = vld [vmem:[#allocation4 + $0x88] sm:$0xff]
    %v324 = vld [vmem:[#allocation4 + $0x90] sm:$0xff]
    %v325 = vld [vmem:[#allocation4 + $0x98] sm:$0xff]
    %v326 = vld [vmem:[#allocation4 + $0xa0] sm:$0xff]
    %v327 = vld [vmem:[#allocation4 + $0xa8] sm:$0xff]
    %v328 = vld [vmem:[#allocation4 + $0xb0] sm:$0xff]
    %v329 = vld [vmem:[#allocation4 + $0xb8] sm:$0xff]
    %v330 = vld [vmem:[#allocation4 + $0xc0] sm:$0xff]
    %v331 = vld [vmem:[#allocation4 + $0xc8] sm:$0xff]
    %v332 = vld [vmem:[#allocation4 + $0xd0] sm:$0xff]
    %v333 = vld [vmem:[#allocation4 + $0xd8] sm:$0xff]
    %v334 = vld [vmem:[#allocation4 + $0xe0] sm:$0xff]
    %v335 = vld [vmem:[#allocation4 + $0xe8] sm:$0xff]
    %v336 = vld [vmem:[#allocation4 + $0xf0] sm:$0xff]
    %v337 = vld [vmem:[#allocation4 + $0xf8] sm:$0xff]
    %v338 = vld [vmem:[#allocation4 + $0x100] sm:$0xff]
    %v339 = vld [vmem:[#allocation4 + $0x108] sm:$0xff]
    %v340 = vld [vmem:[#allocation4 + $0x110] sm:$0xff]
    %v341 = vld [vmem:[#allocation4 + $0x118] sm:$0xff]
    %v342 = vld [vmem:[#allocation4 + $0x120] sm:$0xff]
    %v343 = vld [vmem:[#allocation4 + $0x128] sm:$0xff]
    %v344 = vld [vmem:[#allocation4 + $0x130] sm:$0xff]
    %v345 = vld [vmem:[#allocation4 + $0x138] sm:$0xff]
    %v346 = vld [vmem:[#allocation4 + $0x140] sm:$0xff]
    %v347 = vld [vmem:[#allocation4 + $0x148] sm:$0xff]
    %v348 = vld [vmem:[#allocation4 + $0x150] sm:$0xff]
    %v349 = vld [vmem:[#allocation4 + $0x158] sm:$0xff]
    %v350 = vld [vmem:[#allocation4 + $0x160] sm:$0xff]
    %v351 = vld [vmem:[#allocation4 + $0x168] sm:$0xff]
    %v352 = vld [vmem:[#allocation4 + $0x170] sm:$0xff]
    %v353 = vld [vmem:[#allocation4 + $0x178] sm:$0xff]
    %v354 = vld [vmem:[#allocation4 + $0x180] sm:$0xff]
    %v355 = vld [vmem:[#allocation4 + $0x188] sm:$0xff]
    %v356 = vld [vmem:[#allocation4 + $0x190] sm:$0xff]
    %v357 = vld [vmem:[#allocation4 + $0x198] sm:$0xff]
    %v358 = vld [vmem:[#allocation4 + $0x1a0] sm:$0xff]
    %v359 = vld [vmem:[#allocation4 + $0x1a8] sm:$0xff]
    %v360 = vld [vmem:[#allocation4 + $0x1b0] sm:$0xff]
    %v361 = vld [vmem:[#allocation4 + $0x1b8] sm:$0xff]
    %v362 = vld [vmem:[#allocation4 + $0x1c0] sm:$0xff]
    %v363 = vld [vmem:[#allocation4 + $0x1c8] sm:$0xff]
    %v364 = vld [vmem:[#allocation4 + $0x1d0] sm:$0xff]
    %v365 = vld [vmem:[#allocation4 + $0x1d8] sm:$0xff]
    %v366 = vld [vmem:[#allocation4 + $0x1e0] sm:$0xff]
    %v367 = vld [vmem:[#allocation4 + $0x1e8] sm:$0xff]
    %v368 = vld [vmem:[#allocation4 + $0x1f0] sm:$0xff]
    %v369 = vld [vmem:[#allocation4 + $0x1f8] sm:$0xff]
    %370 = vmatpush.msra.mxu0 %v366
    %371 = vmatpush.msra.mxu0 %v362
    %372 = vmatpush.msra.mxu0 %v358
    %373 = vmatpush.msra.mxu0 %v354
    %374 = vmatpush.msra.mxu0 %v350
    %375 = vmatpush.msra.mxu0 %v346
    %376 = vmatpush.msra.mxu0 %v342
    %377 = vmatpush.msra.mxu0 %v338
    %378 = vmatpush.msra.mxu0 %v334
    %379 = vmatpush.msra.mxu0 %v330
    %380 = vmatpush.msra.mxu0 %v326
    %381 = vmatpush.msra.mxu0 %v322
    %382 = vmatpush.msra.mxu0 %v318
    %383 = vmatpush.msra.mxu0 %v314
    %384 = vmatpush.msra.mxu0 %v310
    %385 = vmatpush.msra.mxu0 %v306
    %386 = vmatmul.f32.gmra.mxu0 %v305
    %v387 = vpop.f32.mrf.mxu0
    %v388 = vadd.f32 0.0, %v387
    %389 = vdwg.mxu0
    %390 = vmatpush.msra.mxu0 %v367
    %391 = vmatpush.msra.mxu0 %v363
    %392 = vmatpush.msra.mxu0 %v359
    %393 = vmatpush.msra.mxu0 %v355
    %394 = vmatpush.msra.mxu0 %v351
    %395 = vmatpush.msra.mxu0 %v347
    %396 = vmatpush.msra.mxu0 %v343
    %397 = vmatpush.msra.mxu0 %v339
    %398 = vmatpush.msra.mxu0 %v335
    %399 = vmatpush.msra.mxu0 %v331
    %400 = vmatpush.msra.mxu0 %v327
    %401 = vmatpush.msra.mxu0 %v323
    %402 = vmatpush.msra.mxu0 %v319
    %403 = vmatpush.msra.mxu0 %v315
    %404 = vmatpush.msra.mxu0 %v311
    %405 = vmatpush.msra.mxu0 %v307
    %406 = vmatmul.f32.gmra.mxu0 %v305
    %v407 = vpop.f32.mrf.mxu0
    %v408 = vadd.f32 0.0, %v407
    %409 = vdwg.mxu0
    %410 = vmatpush.msra.mxu0 %v368
    %411 = vmatpush.msra.mxu0 %v364
    %412 = vmatpush.msra.mxu0 %v360
    %413 = vmatpush.msra.mxu0 %v356
    %414 = vmatpush.msra.mxu0 %v352
    %415 = vmatpush.msra.mxu0 %v348
    %416 = vmatpush.msra.mxu0 %v344
    %417 = vmatpush.msra.mxu0 %v340
    %418 = vmatpush.msra.mxu0 %v336
    %419 = vmatpush.msra.mxu0 %v332
    %420 = vmatpush.msra.mxu0 %v328
    %421 = vmatpush.msra.mxu0 %v324
    %422 = vmatpush.msra.mxu0 %v320
    %423 = vmatpush.msra.mxu0 %v316
    %424 = vmatpush.msra.mxu0 %v312
    %425 = vmatpush.msra.mxu0 %v308
    %426 = vmatmul.f32.gmra.mxu0 %v305
    %v427 = vpop.f32.mrf.mxu0
    %v428 = vadd.f32 0.0, %v427
    %429 = vdwg.mxu0
    %430 = vmatpush.msra.mxu0 %v369
    %431 = vmatpush.msra.mxu0 %v365
    %432 = vmatpush.msra.mxu0 %v361
    %433 = vmatpush.msra.mxu0 %v357
    %434 = vmatpush.msra.mxu0 %v353
    %435 = vmatpush.msra.mxu0 %v349
    %436 = vmatpush.msra.mxu0 %v345
    %437 = vmatpush.msra.mxu0 %v341
    %438 = vmatpush.msra.mxu0 %v337
    %439 = vmatpush.msra.mxu0 %v333
    %440 = vmatpush.msra.mxu0 %v329
    %441 = vmatpush.msra.mxu0 %v325
    %442 = vmatpush.msra.mxu0 %v321
    %443 = vmatpush.msra.mxu0 %v317
    %444 = vmatpush.msra.mxu0 %v313
    %445 = vmatpush.msra.mxu0 %v309
    %446 = vmatmul.f32.gmra.mxu0 %v305
    %v447 = vpop.f32.mrf.mxu0
    %v448 = vadd.f32 0.0, %v447
    %449 = vdwg.mxu0
    %v454 = vrot.slane %v408, 6
    %v455 = vrot.slane %v428, 4
    %v456 = vrot.slane %v448, 2
    %v457 = vsel %vm222, %v388, %v454
    %v458 = vsel %vm224, %v455, %v456
    %v459 = vsel %vm226, %v457, %v458
    %v461 = vadd.f32 %v304, %v459
    %v462 = vxor.u32 %v461, 2147483648
    %v463 = vmul.f32 %v462, 1.442695
    %v464 = vpow.pop %v463
    %v465 = vadd.f32 %v464, 1.0
    %v466 = vrcp.pop %v465
    %v467 = vmul.f32 %v465, %v466
    %v468 = vsub.f32 1.0, %v467
    %v469 = vmul.f32 %v466, %v468
    %v470 = vadd.f32 %v466, %v469
    %vm471 = vweird.f32 %v465
    %vm472 = vweird.f32 %v466
    %vm473 = vmor %vm471, %vm472
    %v474 = vsel %vm473, %v466, %v470
    %v475 = vand.u32 2147483647, %v465
    %vm476 = vcmp.eq.f32.partialorder %v475, 8.507059e+37
    %v477 = vand.u32 %v465, 2147483648
    %v478 = vor.u32 1.1754944e-38, %v477
    %v479 = vsel %vm476, %v478, %v474
    %v480 = vmul.f32 1.0, %v479
    %v482 = vrot.slane %v461, 2
    %v484 = vxor.u32 %v482, 2147483648
    %v485 = vmul.f32 %v484, 1.442695
    %v486 = vpow.pop %v485
    %v487 = vadd.f32 %v486, 1.0
    %v488 = vrcp.pop %v487
    %v489 = vmul.f32 %v487, %v488
    %v490 = vsub.f32 1.0, %v489
    %v491 = vmul.f32 %v488, %v490
    %v492 = vadd.f32 %v488, %v491
    %vm493 = vweird.f32 %v487
    %vm494 = vweird.f32 %v488
    %vm495 = vmor %vm493, %vm494
    %v496 = vsel %vm495, %v488, %v492
    %v497 = vand.u32 2147483647, %v487
    %vm498 = vcmp.eq.f32.partialorder %v497, 8.507059e+37
    %v499 = vand.u32 %v487, 2147483648
    %v500 = vor.u32 1.1754944e-38, %v499
    %v501 = vsel %vm498, %v500, %v496
    %v502 = vmul.f32 1.0, %v501
    %v503 = vrot.slane %v461, 4
    %v505 = vtanh.pop %v503
    %v506 = vrot.slane %v461, 6
    %v508 = vxor.u32 %v506, 2147483648
    %v509 = vmul.f32 %v508, 1.442695
    %v510 = vpow.pop %v509
    %v511 = vadd.f32 %v510, 1.0
    %v512 = vrcp.pop %v511
    %v513 = vmul.f32 %v511, %v512
    %v514 = vsub.f32 1.0, %v513
    %v515 = vmul.f32 %v512, %v514
    %v516 = vadd.f32 %v512, %v515
    %vm517 = vweird.f32 %v511
    %vm518 = vweird.f32 %v512
    %vm519 = vmor %vm517, %vm518
    %v520 = vsel %vm519, %v512, %v516
    %v521 = vand.u32 2147483647, %v511
    %vm522 = vcmp.eq.f32.partialorder %v521, 8.507059e+37
    %v523 = vand.u32 %v511, 2147483648
    %v524 = vor.u32 1.1754944e-38, %v523
    %v525 = vsel %vm522, %v524, %v520
    %v526 = vmul.f32 1.0, %v525
    %v527 = vld [vmem:[#allocation3] sm:$0x3]
    %v528 = vmul.f32 %v502, %v527
    %v529 = vmul.f32 %v480, %v505
    %v530 = vadd.f32 %v528, %v529
    %531 = vst [vmem:[#allocation3] sm:$0x3] %v530
    %v532 = vtanh.pop %v530
    %v533 = vmul.f32 %v526, %v532
    %534 = vst [vmem:[#allocation2] sm:$0x3] %v533
    %s535 = scalar_lea.vmem %s0, 16
    %v536 = vld [vmem:[%s535] sm:$0xff]
    %v537 = vld [vmem:[#allocation2] sm:$0x3]
    %v538 = vld [vmem:[#allocation4] sm:$0xff]
    %v539 = vld [vmem:[#allocation4 + $0x8] sm:$0xff]
    %v540 = vld [vmem:[#allocation4 + $0x10] sm:$0xff]
    %v541 = vld [vmem:[#allocation4 + $0x18] sm:$0xff]
    %v542 = vld [vmem:[#allocation4 + $0x20] sm:$0xff]
    %v543 = vld [vmem:[#allocation4 + $0x28] sm:$0xff]
    %v544 = vld [vmem:[#allocation4 + $0x30] sm:$0xff]
    %v545 = vld [vmem:[#allocation4 + $0x38] sm:$0xff]
    %v546 = vld [vmem:[#allocation4 + $0x40] sm:$0xff]
    %v547 = vld [vmem:[#allocation4 + $0x48] sm:$0xff]
    %v548 = vld [vmem:[#allocation4 + $0x50] sm:$0xff]
    %v549 = vld [vmem:[#allocation4 + $0x58] sm:$0xff]
    %v550 = vld [vmem:[#allocation4 + $0x60] sm:$0xff]
    %v551 = vld [vmem:[#allocation4 + $0x68] sm:$0xff]
    %v552 = vld [vmem:[#allocation4 + $0x70] sm:$0xff]
    %v553 = vld [vmem:[#allocation4 + $0x78] sm:$0xff]
    %v554 = vld [vmem:[#allocation4 + $0x80] sm:$0xff]
    %v555 = vld [vmem:[#allocation4 + $0x88] sm:$0xff]
    %v556 = vld [vmem:[#allocation4 + $0x90] sm:$0xff]
    %v557 = vld [vmem:[#allocation4 + $0x98] sm:$0xff]
    %v558 = vld [vmem:[#allocation4 + $0xa0] sm:$0xff]
    %v559 = vld [vmem:[#allocation4 + $0xa8] sm:$0xff]
    %v560 = vld [vmem:[#allocation4 + $0xb0] sm:$0xff]
    %v561 = vld [vmem:[#allocation4 + $0xb8] sm:$0xff]
    %v562 = vld [vmem:[#allocation4 + $0xc0] sm:$0xff]
    %v563 = vld [vmem:[#allocation4 + $0xc8] sm:$0xff]
    %v564 = vld [vmem:[#allocation4 + $0xd0] sm:$0xff]
    %v565 = vld [vmem:[#allocation4 + $0xd8] sm:$0xff]
    %v566 = vld [vmem:[#allocation4 + $0xe0] sm:$0xff]
    %v567 = vld [vmem:[#allocation4 + $0xe8] sm:$0xff]
    %v568 = vld [vmem:[#allocation4 + $0xf0] sm:$0xff]
    %v569 = vld [vmem:[#allocation4 + $0xf8] sm:$0xff]
    %v570 = vld [vmem:[#allocation4 + $0x100] sm:$0xff]
    %v571 = vld [vmem:[#allocation4 + $0x108] sm:$0xff]
    %v572 = vld [vmem:[#allocation4 + $0x110] sm:$0xff]
    %v573 = vld [vmem:[#allocation4 + $0x118] sm:$0xff]
    %v574 = vld [vmem:[#allocation4 + $0x120] sm:$0xff]
    %v575 = vld [vmem:[#allocation4 + $0x128] sm:$0xff]
    %v576 = vld [vmem:[#allocation4 + $0x130] sm:$0xff]
    %v577 = vld [vmem:[#allocation4 + $0x138] sm:$0xff]
    %v578 = vld [vmem:[#allocation4 + $0x140] sm:$0xff]
    %v579 = vld [vmem:[#allocation4 + $0x148] sm:$0xff]
    %v580 = vld [vmem:[#allocation4 + $0x150] sm:$0xff]
    %v581 = vld [vmem:[#allocation4 + $0x158] sm:$0xff]
    %v582 = vld [vmem:[#allocation4 + $0x160] sm:$0xff]
    %v583 = vld [vmem:[#allocation4 + $0x168] sm:$0xff]
    %v584 = vld [vmem:[#allocation4 + $0x170] sm:$0xff]
    %v585 = vld [vmem:[#allocation4 + $0x178] sm:$0xff]
    %v586 = vld [vmem:[#allocation4 + $0x180] sm:$0xff]
    %v587 = vld [vmem:[#allocation4 + $0x188] sm:$0xff]
    %v588 = vld [vmem:[#allocation4 + $0x190] sm:$0xff]
    %v589 = vld [vmem:[#allocation4 + $0x198] sm:$0xff]
    %v590 = vld [vmem:[#allocation4 + $0x1a0] sm:$0xff]
    %v591 = vld [vmem:[#allocation4 + $0x1a8] sm:$0xff]
    %v592 = vld [vmem:[#allocation4 + $0x1b0] sm:$0xff]
    %v593 = vld [vmem:[#allocation4 + $0x1b8] sm:$0xff]
    %v594 = vld [vmem:[#allocation4 + $0x1c0] sm:$0xff]
    %v595 = vld [vmem:[#allocation4 + $0x1c8] sm:$0xff]
    %v596 = vld [vmem:[#allocation4 + $0x1d0] sm:$0xff]
    %v597 = vld [vmem:[#allocation4 + $0x1d8] sm:$0xff]
    %v598 = vld [vmem:[#allocation4 + $0x1e0] sm:$0xff]
    %v599 = vld [vmem:[#allocation4 + $0x1e8] sm:$0xff]
    %v600 = vld [vmem:[#allocation4 + $0x1f0] sm:$0xff]
    %v601 = vld [vmem:[#allocation4 + $0x1f8] sm:$0xff]
    %602 = vmatpush.msra.mxu0 %v598
    %603 = vmatpush.msra.mxu0 %v594
    %604 = vmatpush.msra.mxu0 %v590
    %605 = vmatpush.msra.mxu0 %v586
    %606 = vmatpush.msra.mxu0 %v582
    %607 = vmatpush.msra.mxu0 %v578
    %608 = vmatpush.msra.mxu0 %v574
    %609 = vmatpush.msra.mxu0 %v570
    %610 = vmatpush.msra.mxu0 %v566
    %611 = vmatpush.msra.mxu0 %v562
    %612 = vmatpush.msra.mxu0 %v558
    %613 = vmatpush.msra.mxu0 %v554
    %614 = vmatpush.msra.mxu0 %v550
    %615 = vmatpush.msra.mxu0 %v546
    %616 = vmatpush.msra.mxu0 %v542
    %617 = vmatpush.msra.mxu0 %v538
    %618 = vmatmul.f32.gmra.mxu0 %v537
    %v619 = vpop.f32.mrf.mxu0
    %v620 = vadd.f32 0.0, %v619
    %621 = vdwg.mxu0
    %622 = vmatpush.msra.mxu0 %v599
    %623 = vmatpush.msra.mxu0 %v595
    %624 = vmatpush.msra.mxu0 %v591
    %625 = vmatpush.msra.mxu0 %v587
    %626 = vmatpush.msra.mxu0 %v583
    %627 = vmatpush.msra.mxu0 %v579
    %628 = vmatpush.msra.mxu0 %v575
    %629 = vmatpush.msra.mxu0 %v571
    %630 = vmatpush.msra.mxu0 %v567
    %631 = vmatpush.msra.mxu0 %v563
    %632 = vmatpush.msra.mxu0 %v559
    %633 = vmatpush.msra.mxu0 %v555
    %634 = vmatpush.msra.mxu0 %v551
    %635 = vmatpush.msra.mxu0 %v547
    %636 = vmatpush.msra.mxu0 %v543
    %637 = vmatpush.msra.mxu0 %v539
    %638 = vmatmul.f32.gmra.mxu0 %v537
    %v639 = vpop.f32.mrf.mxu0
    %v640 = vadd.f32 0.0, %v639
    %641 = vdwg.mxu0
    %642 = vmatpush.msra.mxu0 %v600
    %643 = vmatpush.msra.mxu0 %v596
    %644 = vmatpush.msra.mxu0 %v592
    %645 = vmatpush.msra.mxu0 %v588
    %646 = vmatpush.msra.mxu0 %v584
    %647 = vmatpush.msra.mxu0 %v580
    %648 = vmatpush.msra.mxu0 %v576
    %649 = vmatpush.msra.mxu0 %v572
    %650 = vmatpush.msra.mxu0 %v568
    %651 = vmatpush.msra.mxu0 %v564
    %652 = vmatpush.msra.mxu0 %v560
    %653 = vmatpush.msra.mxu0 %v556
    %654 = vmatpush.msra.mxu0 %v552
    %655 = vmatpush.msra.mxu0 %v548
    %656 = vmatpush.msra.mxu0 %v544
    %657 = vmatpush.msra.mxu0 %v540
    %658 = vmatmul.f32.gmra.mxu0 %v537
    %v659 = vpop.f32.mrf.mxu0
    %v660 = vadd.f32 0.0, %v659
    %661 = vdwg.mxu0
    %662 = vmatpush.msra.mxu0 %v601
    %663 = vmatpush.msra.mxu0 %v597
    %664 = vmatpush.msra.mxu0 %v593
    %665 = vmatpush.msra.mxu0 %v589
    %666 = vmatpush.msra.mxu0 %v585
    %667 = vmatpush.msra.mxu0 %v581
    %668 = vmatpush.msra.mxu0 %v577
    %669 = vmatpush.msra.mxu0 %v573
    %670 = vmatpush.msra.mxu0 %v569
    %671 = vmatpush.msra.mxu0 %v565
    %672 = vmatpush.msra.mxu0 %v561
    %673 = vmatpush.msra.mxu0 %v557
    %674 = vmatpush.msra.mxu0 %v553
    %675 = vmatpush.msra.mxu0 %v549
    %676 = vmatpush.msra.mxu0 %v545
    %677 = vmatpush.msra.mxu0 %v541
    %678 = vmatmul.f32.gmra.mxu0 %v537
    %v679 = vpop.f32.mrf.mxu0
    %v680 = vadd.f32 0.0, %v679
    %681 = vdwg.mxu0
    %v686 = vrot.slane %v640, 6
    %v687 = vrot.slane %v660, 4
    %v688 = vrot.slane %v680, 2
    %v689 = vsel %vm222, %v620, %v686
    %v690 = vsel %vm224, %v687, %v688
    %v691 = vsel %vm226, %v689, %v690
    %v693 = vadd.f32 %v536, %v691
    %v694 = vxor.u32 %v693, 2147483648
    %v695 = vmul.f32 %v694, 1.442695
    %v696 = vpow.pop %v695
    %v697 = vadd.f32 %v696, 1.0
    %v698 = vrcp.pop %v697
    %v699 = vmul.f32 %v697, %v698
    %v700 = vsub.f32 1.0, %v699
    %v701 = vmul.f32 %v698, %v700
    %v702 = vadd.f32 %v698, %v701
    %vm703 = vweird.f32 %v697
    %vm704 = vweird.f32 %v698
    %vm705 = vmor %vm703, %vm704
    %v706 = vsel %vm705, %v698, %v702
    %v707 = vand.u32 2147483647, %v697
    %vm708 = vcmp.eq.f32.partialorder %v707, 8.507059e+37
    %v709 = vand.u32 %v697, 2147483648
    %v710 = vor.u32 1.1754944e-38, %v709
    %v711 = vsel %vm708, %v710, %v706
    %v712 = vmul.f32 1.0, %v711
    %v714 = vrot.slane %v693, 2
    %v716 = vxor.u32 %v714, 2147483648
    %v717 = vmul.f32 %v716, 1.442695
    %v718 = vpow.pop %v717
    %v719 = vadd.f32 %v718, 1.0
    %v720 = vrcp.pop %v719
    %v721 = vmul.f32 %v719, %v720
    %v722 = vsub.f32 1.0, %v721
    %v723 = vmul.f32 %v720, %v722
    %v724 = vadd.f32 %v720, %v723
    %vm725 = vweird.f32 %v719
    %vm726 = vweird.f32 %v720
    %vm727 = vmor %vm725, %vm726
    %v728 = vsel %vm727, %v720, %v724
    %v729 = vand.u32 2147483647, %v719
    %vm730 = vcmp.eq.f32.partialorder %v729, 8.507059e+37
    %v731 = vand.u32 %v719, 2147483648
    %v732 = vor.u32 1.1754944e-38, %v731
    %v733 = vsel %vm730, %v732, %v728
    %v734 = vmul.f32 1.0, %v733
    %v735 = vrot.slane %v693, 4
    %v737 = vtanh.pop %v735
    %v738 = vrot.slane %v693, 6
    %v740 = vxor.u32 %v738, 2147483648
    %v741 = vmul.f32 %v740, 1.442695
    %v742 = vpow.pop %v741
    %v743 = vadd.f32 %v742, 1.0
    %v744 = vrcp.pop %v743
    %v745 = vmul.f32 %v743, %v744
    %v746 = vsub.f32 1.0, %v745
    %v747 = vmul.f32 %v744, %v746
    %v748 = vadd.f32 %v744, %v747
    %vm749 = vweird.f32 %v743
    %vm750 = vweird.f32 %v744
    %vm751 = vmor %vm749, %vm750
    %v752 = vsel %vm751, %v744, %v748
    %v753 = vand.u32 2147483647, %v743
    %vm754 = vcmp.eq.f32.partialorder %v753, 8.507059e+37
    %v755 = vand.u32 %v743, 2147483648
    %v756 = vor.u32 1.1754944e-38, %v755
    %v757 = vsel %vm754, %v756, %v752
    %v758 = vmul.f32 1.0, %v757
    %v759 = vld [vmem:[#allocation3] sm:$0x3]
    %v760 = vmul.f32 %v734, %v759
    %v761 = vmul.f32 %v712, %v737
    %v762 = vadd.f32 %v760, %v761
    %763 = vst [vmem:[#allocation3] sm:$0x3] %v762
    %v764 = vtanh.pop %v762
    %v765 = vmul.f32 %v758, %v764
    %766 = vst [vmem:[#allocation2] sm:$0x3] %v765
    %s767 = scalar_lea.vmem %s0, 24
    %v768 = vld [vmem:[%s767] sm:$0xff]
    %v769 = vld [vmem:[#allocation2] sm:$0x3]
    %v770 = vld [vmem:[#allocation4] sm:$0xff]
    %v771 = vld [vmem:[#allocation4 + $0x8] sm:$0xff]
    %v772 = vld [vmem:[#allocation4 + $0x10] sm:$0xff]
    %v773 = vld [vmem:[#allocation4 + $0x18] sm:$0xff]
    %v774 = vld [vmem:[#allocation4 + $0x20] sm:$0xff]
    %v775 = vld [vmem:[#allocation4 + $0x28] sm:$0xff]
    %v776 = vld [vmem:[#allocation4 + $0x30] sm:$0xff]
    %v777 = vld [vmem:[#allocation4 + $0x38] sm:$0xff]
    %v778 = vld [vmem:[#allocation4 + $0x40] sm:$0xff]
    %v779 = vld [vmem:[#allocation4 + $0x48] sm:$0xff]
    %v780 = vld [vmem:[#allocation4 + $0x50] sm:$0xff]
    %v781 = vld [vmem:[#allocation4 + $0x58] sm:$0xff]
    %v782 = vld [vmem:[#allocation4 + $0x60] sm:$0xff]
    %v783 = vld [vmem:[#allocation4 + $0x68] sm:$0xff]
    %v784 = vld [vmem:[#allocation4 + $0x70] sm:$0xff]
    %v785 = vld [vmem:[#allocation4 + $0x78] sm:$0xff]
    %v786 = vld [vmem:[#allocation4 + $0x80] sm:$0xff]
    %v787 = vld [vmem:[#allocation4 + $0x88] sm:$0xff]
    %v788 = vld [vmem:[#allocation4 + $0x90] sm:$0xff]
    %v789 = vld [vmem:[#allocation4 + $0x98] sm:$0xff]
    %v790 = vld [vmem:[#allocation4 + $0xa0] sm:$0xff]
    %v791 = vld [vmem:[#allocation4 + $0xa8] sm:$0xff]
    %v792 = vld [vmem:[#allocation4 + $0xb0] sm:$0xff]
    %v793 = vld [vmem:[#allocation4 + $0xb8] sm:$0xff]
    %v794 = vld [vmem:[#allocation4 + $0xc0] sm:$0xff]
    %v795 = vld [vmem:[#allocation4 + $0xc8] sm:$0xff]
    %v796 = vld [vmem:[#allocation4 + $0xd0] sm:$0xff]
    %v797 = vld [vmem:[#allocation4 + $0xd8] sm:$0xff]
    %v798 = vld [vmem:[#allocation4 + $0xe0] sm:$0xff]
    %v799 = vld [vmem:[#allocation4 + $0xe8] sm:$0xff]
    %v800 = vld [vmem:[#allocation4 + $0xf0] sm:$0xff]
    %v801 = vld [vmem:[#allocation4 + $0xf8] sm:$0xff]
    %v802 = vld [vmem:[#allocation4 + $0x100] sm:$0xff]
    %v803 = vld [vmem:[#allocation4 + $0x108] sm:$0xff]
    %v804 = vld [vmem:[#allocation4 + $0x110] sm:$0xff]
    %v805 = vld [vmem:[#allocation4 + $0x118] sm:$0xff]
    %v806 = vld [vmem:[#allocation4 + $0x120] sm:$0xff]
    %v807 = vld [vmem:[#allocation4 + $0x128] sm:$0xff]
    %v808 = vld [vmem:[#allocation4 + $0x130] sm:$0xff]
    %v809 = vld [vmem:[#allocation4 + $0x138] sm:$0xff]
    %v810 = vld [vmem:[#allocation4 + $0x140] sm:$0xff]
    %v811 = vld [vmem:[#allocation4 + $0x148] sm:$0xff]
    %v812 = vld [vmem:[#allocation4 + $0x150] sm:$0xff]
    %v813 = vld [vmem:[#allocation4 + $0x158] sm:$0xff]
    %v814 = vld [vmem:[#allocation4 + $0x160] sm:$0xff]
    %v815 = vld [vmem:[#allocation4 + $0x168] sm:$0xff]
    %v816 = vld [vmem:[#allocation4 + $0x170] sm:$0xff]
    %v817 = vld [vmem:[#allocation4 + $0x178] sm:$0xff]
    %v818 = vld [vmem:[#allocation4 + $0x180] sm:$0xff]
    %v819 = vld [vmem:[#allocation4 + $0x188] sm:$0xff]
    %v820 = vld [vmem:[#allocation4 + $0x190] sm:$0xff]
    %v821 = vld [vmem:[#allocation4 + $0x198] sm:$0xff]
    %v822 = vld [vmem:[#allocation4 + $0x1a0] sm:$0xff]
    %v823 = vld [vmem:[#allocation4 + $0x1a8] sm:$0xff]
    %v824 = vld [vmem:[#allocation4 + $0x1b0] sm:$0xff]
    %v825 = vld [vmem:[#allocation4 + $0x1b8] sm:$0xff]
    %v826 = vld [vmem:[#allocation4 + $0x1c0] sm:$0xff]
    %v827 = vld [vmem:[#allocation4 + $0x1c8] sm:$0xff]
    %v828 = vld [vmem:[#allocation4 + $0x1d0] sm:$0xff]
    %v829 = vld [vmem:[#allocation4 + $0x1d8] sm:$0xff]
    %v830 = vld [vmem:[#allocation4 + $0x1e0] sm:$0xff]
    %v831 = vld [vmem:[#allocation4 + $0x1e8] sm:$0xff]
    %v832 = vld [vmem:[#allocation4 + $0x1f0] sm:$0xff]
    %v833 = vld [vmem:[#allocation4 + $0x1f8] sm:$0xff]
    %834 = vmatpush.msra.mxu0 %v830
    %835 = vmatpush.msra.mxu0 %v826
    %836 = vmatpush.msra.mxu0 %v822
    %837 = vmatpush.msra.mxu0 %v818
    %838 = vmatpush.msra.mxu0 %v814
    %839 = vmatpush.msra.mxu0 %v810
    %840 = vmatpush.msra.mxu0 %v806
    %841 = vmatpush.msra.mxu0 %v802
    %842 = vmatpush.msra.mxu0 %v798
    %843 = vmatpush.msra.mxu0 %v794
    %844 = vmatpush.msra.mxu0 %v790
    %845 = vmatpush.msra.mxu0 %v786
    %846 = vmatpush.msra.mxu0 %v782
    %847 = vmatpush.msra.mxu0 %v778
    %848 = vmatpush.msra.mxu0 %v774
    %849 = vmatpush.msra.mxu0 %v770
    %850 = vmatmul.f32.gmra.mxu0 %v769
    %v851 = vpop.f32.mrf.mxu0
    %v852 = vadd.f32 0.0, %v851
    %853 = vdwg.mxu0
    %854 = vmatpush.msra.mxu0 %v831
    %855 = vmatpush.msra.mxu0 %v827
    %856 = vmatpush.msra.mxu0 %v823
    %857 = vmatpush.msra.mxu0 %v819
    %858 = vmatpush.msra.mxu0 %v815
    %859 = vmatpush.msra.mxu0 %v811
    %860 = vmatpush.msra.mxu0 %v807
    %861 = vmatpush.msra.mxu0 %v803
    %862 = vmatpush.msra.mxu0 %v799
    %863 = vmatpush.msra.mxu0 %v795
    %864 = vmatpush.msra.mxu0 %v791
    %865 = vmatpush.msra.mxu0 %v787
    %866 = vmatpush.msra.mxu0 %v783
    %867 = vmatpush.msra.mxu0 %v779
    %868 = vmatpush.msra.mxu0 %v775
    %869 = vmatpush.msra.mxu0 %v771
    %870 = vmatmul.f32.gmra.mxu0 %v769
    %v871 = vpop.f32.mrf.mxu0
    %v872 = vadd.f32 0.0, %v871
    %873 = vdwg.mxu0
    %874 = vmatpush.msra.mxu0 %v832
    %875 = vmatpush.msra.mxu0 %v828
    %876 = vmatpush.msra.mxu0 %v824
    %877 = vmatpush.msra.mxu0 %v820
    %878 = vmatpush.msra.mxu0 %v816
    %879 = vmatpush.msra.mxu0 %v812
    %880 = vmatpush.msra.mxu0 %v808
    %881 = vmatpush.msra.mxu0 %v804
    %882 = vmatpush.msra.mxu0 %v800
    %883 = vmatpush.msra.mxu0 %v796
    %884 = vmatpush.msra.mxu0 %v792
    %885 = vmatpush.msra.mxu0 %v788
    %886 = vmatpush.msra.mxu0 %v784
    %887 = vmatpush.msra.mxu0 %v780
    %888 = vmatpush.msra.mxu0 %v776
    %889 = vmatpush.msra.mxu0 %v772
    %890 = vmatmul.f32.gmra.mxu0 %v769
    %v891 = vpop.f32.mrf.mxu0
    %v892 = vadd.f32 0.0, %v891
    %893 = vdwg.mxu0
    %894 = vmatpush.msra.mxu0 %v833
    %895 = vmatpush.msra.mxu0 %v829
    %896 = vmatpush.msra.mxu0 %v825
    %897 = vmatpush.msra.mxu0 %v821
    %898 = vmatpush.msra.mxu0 %v817
    %899 = vmatpush.msra.mxu0 %v813
    %900 = vmatpush.msra.mxu0 %v809
    %901 = vmatpush.msra.mxu0 %v805
    %902 = vmatpush.msra.mxu0 %v801
    %903 = vmatpush.msra.mxu0 %v797
    %904 = vmatpush.msra.mxu0 %v793
    %905 = vmatpush.msra.mxu0 %v789
    %906 = vmatpush.msra.mxu0 %v785
    %907 = vmatpush.msra.mxu0 %v781
    %908 = vmatpush.msra.mxu0 %v777
    %909 = vmatpush.msra.mxu0 %v773
    %910 = vmatmul.f32.gmra.mxu0 %v769
    %v911 = vpop.f32.mrf.mxu0
    %v912 = vadd.f32 0.0, %v911
    %913 = vdwg.mxu0
    %v918 = vrot.slane %v872, 6
    %v919 = vrot.slane %v892, 4
    %v920 = vrot.slane %v912, 2
    %v921 = vsel %vm222, %v852, %v918
    %v922 = vsel %vm224, %v919, %v920
    %v923 = vsel %vm226, %v921, %v922
    %v925 = vadd.f32 %v768, %v923
    %v926 = vxor.u32 %v925, 2147483648
    %v927 = vmul.f32 %v926, 1.442695
    %v928 = vpow.pop %v927
    %v929 = vadd.f32 %v928, 1.0
    %v930 = vrcp.pop %v929
    %v931 = vmul.f32 %v929, %v930
    %v932 = vsub.f32 1.0, %v931
    %v933 = vmul.f32 %v930, %v932
    %v934 = vadd.f32 %v930, %v933
    %vm935 = vweird.f32 %v929
    %vm936 = vweird.f32 %v930
    %vm937 = vmor %vm935, %vm936
    %v938 = vsel %vm937, %v930, %v934
    %v939 = vand.u32 2147483647, %v929
    %vm940 = vcmp.eq.f32.partialorder %v939, 8.507059e+37
    %v941 = vand.u32 %v929, 2147483648
    %v942 = vor.u32 1.1754944e-38, %v941
    %v943 = vsel %vm940, %v942, %v938
    %v944 = vmul.f32 1.0, %v943
    %v946 = vrot.slane %v925, 2
    %v948 = vxor.u32 %v946, 2147483648
    %v949 = vmul.f32 %v948, 1.442695
    %v950 = vpow.pop %v949
    %v951 = vadd.f32 %v950, 1.0
    %v952 = vrcp.pop %v951
    %v953 = vmul.f32 %v951, %v952
    %v954 = vsub.f32 1.0, %v953
    %v955 = vmul.f32 %v952, %v954
    %v956 = vadd.f32 %v952, %v955
    %vm957 = vweird.f32 %v951
    %vm958 = vweird.f32 %v952
    %vm959 = vmor %vm957, %vm958
    %v960 = vsel %vm959, %v952, %v956
    %v961 = vand.u32 2147483647, %v951
    %vm962 = vcmp.eq.f32.partialorder %v961, 8.507059e+37
    %v963 = vand.u32 %v951, 2147483648
    %v964 = vor.u32 1.1754944e-38, %v963
    %v965 = vsel %vm962, %v964, %v960
    %v966 = vmul.f32 1.0, %v965
    %v967 = vrot.slane %v925, 4
    %v969 = vtanh.pop %v967
    %v970 = vrot.slane %v925, 6
    %v972 = vxor.u32 %v970, 2147483648
    %v973 = vmul.f32 %v972, 1.442695
    %v974 = vpow.pop %v973
    %v975 = vadd.f32 %v974, 1.0
    %v976 = vrcp.pop %v975
    %v977 = vmul.f32 %v975, %v976
    %v978 = vsub.f32 1.0, %v977
    %v979 = vmul.f32 %v976, %v978
    %v980 = vadd.f32 %v976, %v979
    %vm981 = vweird.f32 %v975
    %vm982 = vweird.f32 %v976
    %vm983 = vmor %vm981, %vm982
    %v984 = vsel %vm983, %v976, %v980
    %v985 = vand.u32 2147483647, %v975
    %vm986 = vcmp.eq.f32.partialorder %v985, 8.507059e+37
    %v987 = vand.u32 %v975, 2147483648
    %v988 = vor.u32 1.1754944e-38, %v987
    %v989 = vsel %vm986, %v988, %v984
    %v990 = vmul.f32 1.0, %v989
    %v991 = vld [vmem:[#allocation3] sm:$0x3]
    %v992 = vmul.f32 %v966, %v991
    %v993 = vmul.f32 %v944, %v969
    %v994 = vadd.f32 %v992, %v993
    %995 = vst [vmem:[#allocation3] sm:$0x3] %v994
    %v996 = vtanh.pop %v994
    %v997 = vmul.f32 %v990, %v996
    %998 = vst [vmem:[#allocation2] sm:$0x3] %v997
    %s999 = scalar_lea.vmem %s0, 32
    %v1000 = vld [vmem:[%s999] sm:$0xff]
    %v1001 = vld [vmem:[#allocation2] sm:$0x3]
    %v1002 = vld [vmem:[#allocation4] sm:$0xff]
    %v1003 = vld [vmem:[#allocation4 + $0x8] sm:$0xff]
    %v1004 = vld [vmem:[#allocation4 + $0x10] sm:$0xff]
    %v1005 = vld [vmem:[#allocation4 + $0x18] sm:$0xff]
    %v1006 = vld [vmem:[#allocation4 + $0x20] sm:$0xff]
    %v1007 = vld [vmem:[#allocation4 + $0x28] sm:$0xff]
    %v1008 = vld [vmem:[#allocation4 + $0x30] sm:$0xff]
    %v1009 = vld [vmem:[#allocation4 + $0x38] sm:$0xff]
    %v1010 = vld [vmem:[#allocation4 + $0x40] sm:$0xff]
    %v1011 = vld [vmem:[#allocation4 + $0x48] sm:$0xff]
    %v1012 = vld [vmem:[#allocation4 + $0x50] sm:$0xff]
    %v1013 = vld [vmem:[#allocation4 + $0x58] sm:$0xff]
    %v1014 = vld [vmem:[#allocation4 + $0x60] sm:$0xff]
    %v1015 = vld [vmem:[#allocation4 + $0x68] sm:$0xff]
    %v1016 = vld [vmem:[#allocation4 + $0x70] sm:$0xff]
    %v1017 = vld [vmem:[#allocation4 + $0x78] sm:$0xff]
    %v1018 = vld [vmem:[#allocation4 + $0x80] sm:$0xff]
    %v1019 = vld [vmem:[#allocation4 + $0x88] sm:$0xff]
    %v1020 = vld [vmem:[#allocation4 + $0x90] sm:$0xff]
    %v1021 = vld [vmem:[#allocation4 + $0x98] sm:$0xff]
    %v1022 = vld [vmem:[#allocation4 + $0xa0] sm:$0xff]
    %v1023 = vld [vmem:[#allocation4 + $0xa8] sm:$0xff]
    %v1024 = vld [vmem:[#allocation4 + $0xb0] sm:$0xff]
    %v1025 = vld [vmem:[#allocation4 + $0xb8] sm:$0xff]
    %v1026 = vld [vmem:[#allocation4 + $0xc0] sm:$0xff]
    %v1027 = vld [vmem:[#allocation4 + $0xc8] sm:$0xff]
    %v1028 = vld [vmem:[#allocation4 + $0xd0] sm:$0xff]
    %v1029 = vld [vmem:[#allocation4 + $0xd8] sm:$0xff]
    %v1030 = vld [vmem:[#allocation4 + $0xe0] sm:$0xff]
    %v1031 = vld [vmem:[#allocation4 + $0xe8] sm:$0xff]
    %v1032 = vld [vmem:[#allocation4 + $0xf0] sm:$0xff]
    %v1033 = vld [vmem:[#allocation4 + $0xf8] sm:$0xff]
    %v1034 = vld [vmem:[#allocation4 + $0x100] sm:$0xff]
    %v1035 = vld [vmem:[#allocation4 + $0x108] sm:$0xff]
    %v1036 = vld [vmem:[#allocation4 + $0x110] sm:$0xff]
    %v1037 = vld [vmem:[#allocation4 + $0x118] sm:$0xff]
    %v1038 = vld [vmem:[#allocation4 + $0x120] sm:$0xff]
    %v1039 = vld [vmem:[#allocation4 + $0x128] sm:$0xff]
    %v1040 = vld [vmem:[#allocation4 + $0x130] sm:$0xff]
    %v1041 = vld [vmem:[#allocation4 + $0x138] sm:$0xff]
    %v1042 = vld [vmem:[#allocation4 + $0x140] sm:$0xff]
    %v1043 = vld [vmem:[#allocation4 + $0x148] sm:$0xff]
    %v1044 = vld [vmem:[#allocation4 + $0x150] sm:$0xff]
    %v1045 = vld [vmem:[#allocation4 + $0x158] sm:$0xff]
    %v1046 = vld [vmem:[#allocation4 + $0x160] sm:$0xff]
    %v1047 = vld [vmem:[#allocation4 + $0x168] sm:$0xff]
    %v1048 = vld [vmem:[#allocation4 + $0x170] sm:$0xff]
    %v1049 = vld [vmem:[#allocation4 + $0x178] sm:$0xff]
    %v1050 = vld [vmem:[#allocation4 + $0x180] sm:$0xff]
    %v1051 = vld [vmem:[#allocation4 + $0x188] sm:$0xff]
    %v1052 = vld [vmem:[#allocation4 + $0x190] sm:$0xff]
    %v1053 = vld [vmem:[#allocation4 + $0x198] sm:$0xff]
    %v1054 = vld [vmem:[#allocation4 + $0x1a0] sm:$0xff]
    %v1055 = vld [vmem:[#allocation4 + $0x1a8] sm:$0xff]
    %v1056 = vld [vmem:[#allocation4 + $0x1b0] sm:$0xff]
    %v1057 = vld [vmem:[#allocation4 + $0x1b8] sm:$0xff]
    %v1058 = vld [vmem:[#allocation4 + $0x1c0] sm:$0xff]
    %v1059 = vld [vmem:[#allocation4 + $0x1c8] sm:$0xff]
    %v1060 = vld [vmem:[#allocation4 + $0x1d0] sm:$0xff]
    %v1061 = vld [vmem:[#allocation4 + $0x1d8] sm:$0xff]
    %v1062 = vld [vmem:[#allocation4 + $0x1e0] sm:$0xff]
    %v1063 = vld [vmem:[#allocation4 + $0x1e8] sm:$0xff]
    %v1064 = vld [vmem:[#allocation4 + $0x1f0] sm:$0xff]
    %v1065 = vld [vmem:[#allocation4 + $0x1f8] sm:$0xff]
    %1066 = vmatpush.msra.mxu0 %v1062
    %1067 = vmatpush.msra.mxu0 %v1058
    %1068 = vmatpush.msra.mxu0 %v1054
    %1069 = vmatpush.msra.mxu0 %v1050
    %1070 = vmatpush.msra.mxu0 %v1046
    %1071 = vmatpush.msra.mxu0 %v1042
    %1072 = vmatpush.msra.mxu0 %v1038
    %1073 = vmatpush.msra.mxu0 %v1034
    %1074 = vmatpush.msra.mxu0 %v1030
    %1075 = vmatpush.msra.mxu0 %v1026
    %1076 = vmatpush.msra.mxu0 %v1022
    %1077 = vmatpush.msra.mxu0 %v1018
    %1078 = vmatpush.msra.mxu0 %v1014
    %1079 = vmatpush.msra.mxu0 %v1010
    %1080 = vmatpush.msra.mxu0 %v1006
    %1081 = vmatpush.msra.mxu0 %v1002
    %1082 = vmatmul.f32.gmra.mxu0 %v1001
    %v1083 = vpop.f32.mrf.mxu0
    %v1084 = vadd.f32 0.0, %v1083
    %1085 = vdwg.mxu0
    %1086 = vmatpush.msra.mxu0 %v1063
    %1087 = vmatpush.msra.mxu0 %v1059
    %1088 = vmatpush.msra.mxu0 %v1055
    %1089 = vmatpush.msra.mxu0 %v1051
    %1090 = vmatpush.msra.mxu0 %v1047
    %1091 = vmatpush.msra.mxu0 %v1043
    %1092 = vmatpush.msra.mxu0 %v1039
    %1093 = vmatpush.msra.mxu0 %v1035
    %1094 = vmatpush.msra.mxu0 %v1031
    %1095 = vmatpush.msra.mxu0 %v1027
    %1096 = vmatpush.msra.mxu0 %v1023
    %1097 = vmatpush.msra.mxu0 %v1019
    %1098 = vmatpush.msra.mxu0 %v1015
    %1099 = vmatpush.msra.mxu0 %v1011
    %1100 = vmatpush.msra.mxu0 %v1007
    %1101 = vmatpush.msra.mxu0 %v1003
    %1102 = vmatmul.f32.gmra.mxu0 %v1001
    %v1103 = vpop.f32.mrf.mxu0
    %v1104 = vadd.f32 0.0, %v1103
    %1105 = vdwg.mxu0
    %1106 = vmatpush.msra.mxu0 %v1064
    %1107 = vmatpush.msra.mxu0 %v1060
    %1108 = vmatpush.msra.mxu0 %v1056
    %1109 = vmatpush.msra.mxu0 %v1052
    %1110 = vmatpush.msra.mxu0 %v1048
    %1111 = vmatpush.msra.mxu0 %v1044
    %1112 = vmatpush.msra.mxu0 %v1040
    %1113 = vmatpush.msra.mxu0 %v1036
    %1114 = vmatpush.msra.mxu0 %v1032
    %1115 = vmatpush.msra.mxu0 %v1028
    %1116 = vmatpush.msra.mxu0 %v1024
    %1117 = vmatpush.msra.mxu0 %v1020
    %1118 = vmatpush.msra.mxu0 %v1016
    %1119 = vmatpush.msra.mxu0 %v1012
    %1120 = vmatpush.msra.mxu0 %v1008
    %1121 = vmatpush.msra.mxu0 %v1004
    %1122 = vmatmul.f32.gmra.mxu0 %v1001
    %v1123 = vpop.f32.mrf.mxu0
    %v1124 = vadd.f32 0.0, %v1123
    %1125 = vdwg.mxu0
    %1126 = vmatpush.msra.mxu0 %v1065
    %1127 = vmatpush.msra.mxu0 %v1061
    %1128 = vmatpush.msra.mxu0 %v1057
    %1129 = vmatpush.msra.mxu0 %v1053
    %1130 = vmatpush.msra.mxu0 %v1049
    %1131 = vmatpush.msra.mxu0 %v1045
    %1132 = vmatpush.msra.mxu0 %v1041
    %1133 = vmatpush.msra.mxu0 %v1037
    %1134 = vmatpush.msra.mxu0 %v1033
    %1135 = vmatpush.msra.mxu0 %v1029
    %1136 = vmatpush.msra.mxu0 %v1025
    %1137 = vmatpush.msra.mxu0 %v1021
    %1138 = vmatpush.msra.mxu0 %v1017
    %1139 = vmatpush.msra.mxu0 %v1013
    %1140 = vmatpush.msra.mxu0 %v1009
    %1141 = vmatpush.msra.mxu0 %v1005
    %1142 = vmatmul.f32.gmra.mxu0 %v1001
    %v1143 = vpop.f32.mrf.mxu0
    %v1144 = vadd.f32 0.0, %v1143
    %1145 = vdwg.mxu0
    %v1150 = vrot.slane %v1104, 6
    %v1151 = vrot.slane %v1124, 4
    %v1152 = vrot.slane %v1144, 2
    %v1153 = vsel %vm222, %v1084, %v1150
    %v1154 = vsel %vm224, %v1151, %v1152
    %v1155 = vsel %vm226, %v1153, %v1154
    %v1157 = vadd.f32 %v1000, %v1155
    %v1158 = vxor.u32 %v1157, 2147483648
    %v1159 = vmul.f32 %v1158, 1.442695
    %v1160 = vpow.pop %v1159
    %v1161 = vadd.f32 %v1160, 1.0
    %v1162 = vrcp.pop %v1161
    %v1163 = vmul.f32 %v1161, %v1162
    %v1164 = vsub.f32 1.0, %v1163
    %v1165 = vmul.f32 %v1162, %v1164
    %v1166 = vadd.f32 %v1162, %v1165
    %vm1167 = vweird.f32 %v1161
    %vm1168 = vweird.f32 %v1162
    %vm1169 = vmor %vm1167, %vm1168
    %v1170 = vsel %vm1169, %v1162, %v1166
    %v1171 = vand.u32 2147483647, %v1161
    %vm1172 = vcmp.eq.f32.partialorder %v1171, 8.507059e+37
    %v1173 = vand.u32 %v1161, 2147483648
    %v1174 = vor.u32 1.1754944e-38, %v1173
    %v1175 = vsel %vm1172, %v1174, %v1170
    %v1176 = vmul.f32 1.0, %v1175
    %v1178 = vrot.slane %v1157, 2
    %v1180 = vxor.u32 %v1178, 2147483648
    %v1181 = vmul.f32 %v1180, 1.442695
    %v1182 = vpow.pop %v1181
    %v1183 = vadd.f32 %v1182, 1.0
    %v1184 = vrcp.pop %v1183
    %v1185 = vmul.f32 %v1183, %v1184
    %v1186 = vsub.f32 1.0, %v1185
    %v1187 = vmul.f32 %v1184, %v1186
    %v1188 = vadd.f32 %v1184, %v1187
    %vm1189 = vweird.f32 %v1183
    %vm1190 = vweird.f32 %v1184
    %vm1191 = vmor %vm1189, %vm1190
    %v1192 = vsel %vm1191, %v1184, %v1188
    %v1193 = vand.u32 2147483647, %v1183
    %vm1194 = vcmp.eq.f32.partialorder %v1193, 8.507059e+37
    %v1195 = vand.u32 %v1183, 2147483648
    %v1196 = vor.u32 1.1754944e-38, %v1195
    %v1197 = vsel %vm1194, %v1196, %v1192
    %v1198 = vmul.f32 1.0, %v1197
    %v1199 = vrot.slane %v1157, 4
    %v1201 = vtanh.pop %v1199
    %v1202 = vrot.slane %v1157, 6
    %v1204 = vxor.u32 %v1202, 2147483648
    %v1205 = vmul.f32 %v1204, 1.442695
    %v1206 = vpow.pop %v1205
    %v1207 = vadd.f32 %v1206, 1.0
    %v1208 = vrcp.pop %v1207
    %v1209 = vmul.f32 %v1207, %v1208
    %v1210 = vsub.f32 1.0, %v1209
    %v1211 = vmul.f32 %v1208, %v1210
    %v1212 = vadd.f32 %v1208, %v1211
    %vm1213 = vweird.f32 %v1207
    %vm1214 = vweird.f32 %v1208
    %vm1215 = vmor %vm1213, %vm1214
    %v1216 = vsel %vm1215, %v1208, %v1212
    %v1217 = vand.u32 2147483647, %v1207
    %vm1218 = vcmp.eq.f32.partialorder %v1217, 8.507059e+37
    %v1219 = vand.u32 %v1207, 2147483648
    %v1220 = vor.u32 1.1754944e-38, %v1219
    %v1221 = vsel %vm1218, %v1220, %v1216
    %v1222 = vmul.f32 1.0, %v1221
    %v1223 = vld [vmem:[#allocation3] sm:$0x3]
    %v1224 = vmul.f32 %v1198, %v1223
    %v1225 = vmul.f32 %v1176, %v1201
    %v1226 = vadd.f32 %v1224, %v1225
    %1227 = vst [vmem:[#allocation3] sm:$0x3] %v1226
    %v1228 = vtanh.pop %v1226
    %v1229 = vmul.f32 %v1222, %v1228
    %1230 = vst [vmem:[#allocation2] sm:$0x3] %v1229
    %s1231 = scalar_lea.vmem %s0, 40
    %v1232 = vld [vmem:[%s1231] sm:$0xff]
    %v1233 = vld [vmem:[#allocation2] sm:$0x3]
    %v1234 = vld [vmem:[#allocation4] sm:$0xff]
    %v1235 = vld [vmem:[#allocation4 + $0x8] sm:$0xff]
    %v1236 = vld [vmem:[#allocation4 + $0x10] sm:$0xff]
    %v1237 = vld [vmem:[#allocation4 + $0x18] sm:$0xff]
    %v1238 = vld [vmem:[#allocation4 + $0x20] sm:$0xff]
    %v1239 = vld [vmem:[#allocation4 + $0x28] sm:$0xff]
    %v1240 = vld [vmem:[#allocation4 + $0x30] sm:$0xff]
    %v1241 = vld [vmem:[#allocation4 + $0x38] sm:$0xff]
    %v1242 = vld [vmem:[#allocation4 + $0x40] sm:$0xff]
    %v1243 = vld [vmem:[#allocation4 + $0x48] sm:$0xff]
    %v1244 = vld [vmem:[#allocation4 + $0x50] sm:$0xff]
    %v1245 = vld [vmem:[#allocation4 + $0x58] sm:$0xff]
    %v1246 = vld [vmem:[#allocation4 + $0x60] sm:$0xff]
    %v1247 = vld [vmem:[#allocation4 + $0x68] sm:$0xff]
    %v1248 = vld [vmem:[#allocation4 + $0x70] sm:$0xff]
    %v1249 = vld [vmem:[#allocation4 + $0x78] sm:$0xff]
    %v1250 = vld [vmem:[#allocation4 + $0x80] sm:$0xff]
    %v1251 = vld [vmem:[#allocation4 + $0x88] sm:$0xff]
    %v1252 = vld [vmem:[#allocation4 + $0x90] sm:$0xff]
    %v1253 = vld [vmem:[#allocation4 + $0x98] sm:$0xff]
    %v1254 = vld [vmem:[#allocation4 + $0xa0] sm:$0xff]
    %v1255 = vld [vmem:[#allocation4 + $0xa8] sm:$0xff]
    %v1256 = vld [vmem:[#allocation4 + $0xb0] sm:$0xff]
    %v1257 = vld [vmem:[#allocation4 + $0xb8] sm:$0xff]
    %v1258 = vld [vmem:[#allocation4 + $0xc0] sm:$0xff]
    %v1259 = vld [vmem:[#allocation4 + $0xc8] sm:$0xff]
    %v1260 = vld [vmem:[#allocation4 + $0xd0] sm:$0xff]
    %v1261 = vld [vmem:[#allocation4 + $0xd8] sm:$0xff]
    %v1262 = vld [vmem:[#allocation4 + $0xe0] sm:$0xff]
    %v1263 = vld [vmem:[#allocation4 + $0xe8] sm:$0xff]
    %v1264 = vld [vmem:[#allocation4 + $0xf0] sm:$0xff]
    %v1265 = vld [vmem:[#allocation4 + $0xf8] sm:$0xff]
    %v1266 = vld [vmem:[#allocation4 + $0x100] sm:$0xff]
    %v1267 = vld [vmem:[#allocation4 + $0x108] sm:$0xff]
    %v1268 = vld [vmem:[#allocation4 + $0x110] sm:$0xff]
    %v1269 = vld [vmem:[#allocation4 + $0x118] sm:$0xff]
    %v1270 = vld [vmem:[#allocation4 + $0x120] sm:$0xff]
    %v1271 = vld [vmem:[#allocation4 + $0x128] sm:$0xff]
    %v1272 = vld [vmem:[#allocation4 + $0x130] sm:$0xff]
    %v1273 = vld [vmem:[#allocation4 + $0x138] sm:$0xff]
    %v1274 = vld [vmem:[#allocation4 + $0x140] sm:$0xff]
    %v1275 = vld [vmem:[#allocation4 + $0x148] sm:$0xff]
    %v1276 = vld [vmem:[#allocation4 + $0x150] sm:$0xff]
    %v1277 = vld [vmem:[#allocation4 + $0x158] sm:$0xff]
    %v1278 = vld [vmem:[#allocation4 + $0x160] sm:$0xff]
    %v1279 = vld [vmem:[#allocation4 + $0x168] sm:$0xff]
    %v1280 = vld [vmem:[#allocation4 + $0x170] sm:$0xff]
    %v1281 = vld [vmem:[#allocation4 + $0x178] sm:$0xff]
    %v1282 = vld [vmem:[#allocation4 + $0x180] sm:$0xff]
    %v1283 = vld [vmem:[#allocation4 + $0x188] sm:$0xff]
    %v1284 = vld [vmem:[#allocation4 + $0x190] sm:$0xff]
    %v1285 = vld [vmem:[#allocation4 + $0x198] sm:$0xff]
    %v1286 = vld [vmem:[#allocation4 + $0x1a0] sm:$0xff]
    %v1287 = vld [vmem:[#allocation4 + $0x1a8] sm:$0xff]
    %v1288 = vld [vmem:[#allocation4 + $0x1b0] sm:$0xff]
    %v1289 = vld [vmem:[#allocation4 + $0x1b8] sm:$0xff]
    %v1290 = vld [vmem:[#allocation4 + $0x1c0] sm:$0xff]
    %v1291 = vld [vmem:[#allocation4 + $0x1c8] sm:$0xff]
    %v1292 = vld [vmem:[#allocation4 + $0x1d0] sm:$0xff]
    %v1293 = vld [vmem:[#allocation4 + $0x1d8] sm:$0xff]
    %v1294 = vld [vmem:[#allocation4 + $0x1e0] sm:$0xff]
    %v1295 = vld [vmem:[#allocation4 + $0x1e8] sm:$0xff]
    %v1296 = vld [vmem:[#allocation4 + $0x1f0] sm:$0xff]
    %v1297 = vld [vmem:[#allocation4 + $0x1f8] sm:$0xff]
    %1298 = vmatpush.msra.mxu0 %v1294
    %1299 = vmatpush.msra.mxu0 %v1290
    %1300 = vmatpush.msra.mxu0 %v1286
    %1301 = vmatpush.msra.mxu0 %v1282
    %1302 = vmatpush.msra.mxu0 %v1278
    %1303 = vmatpush.msra.mxu0 %v1274
    %1304 = vmatpush.msra.mxu0 %v1270
    %1305 = vmatpush.msra.mxu0 %v1266
    %1306 = vmatpush.msra.mxu0 %v1262
    %1307 = vmatpush.msra.mxu0 %v1258
    %1308 = vmatpush.msra.mxu0 %v1254
    %1309 = vmatpush.msra.mxu0 %v1250
    %1310 = vmatpush.msra.mxu0 %v1246
    %1311 = vmatpush.msra.mxu0 %v1242
    %1312 = vmatpush.msra.mxu0 %v1238
    %1313 = vmatpush.msra.mxu0 %v1234
    %1314 = vmatmul.f32.gmra.mxu0 %v1233
    %v1315 = vpop.f32.mrf.mxu0
    %v1316 = vadd.f32 0.0, %v1315
    %1317 = vdwg.mxu0
    %1318 = vmatpush.msra.mxu0 %v1295
    %1319 = vmatpush.msra.mxu0 %v1291
    %1320 = vmatpush.msra.mxu0 %v1287
    %1321 = vmatpush.msra.mxu0 %v1283
    %1322 = vmatpush.msra.mxu0 %v1279
    %1323 = vmatpush.msra.mxu0 %v1275
    %1324 = vmatpush.msra.mxu0 %v1271
    %1325 = vmatpush.msra.mxu0 %v1267
    %1326 = vmatpush.msra.mxu0 %v1263
    %1327 = vmatpush.msra.mxu0 %v1259
    %1328 = vmatpush.msra.mxu0 %v1255
    %1329 = vmatpush.msra.mxu0 %v1251
    %1330 = vmatpush.msra.mxu0 %v1247
    %1331 = vmatpush.msra.mxu0 %v1243
    %1332 = vmatpush.msra.mxu0 %v1239
    %1333 = vmatpush.msra.mxu0 %v1235
    %1334 = vmatmul.f32.gmra.mxu0 %v1233
    %v1335 = vpop.f32.mrf.mxu0
    %v1336 = vadd.f32 0.0, %v1335
    %1337 = vdwg.mxu0
    %1338 = vmatpush.msra.mxu0 %v1296
    %1339 = vmatpush.msra.mxu0 %v1292
    %1340 = vmatpush.msra.mxu0 %v1288
    %1341 = vmatpush.msra.mxu0 %v1284
    %1342 = vmatpush.msra.mxu0 %v1280
    %1343 = vmatpush.msra.mxu0 %v1276
    %1344 = vmatpush.msra.mxu0 %v1272
    %1345 = vmatpush.msra.mxu0 %v1268
    %1346 = vmatpush.msra.mxu0 %v1264
    %1347 = vmatpush.msra.mxu0 %v1260
    %1348 = vmatpush.msra.mxu0 %v1256
    %1349 = vmatpush.msra.mxu0 %v1252
    %1350 = vmatpush.msra.mxu0 %v1248
    %1351 = vmatpush.msra.mxu0 %v1244
    %1352 = vmatpush.msra.mxu0 %v1240
    %1353 = vmatpush.msra.mxu0 %v1236
    %1354 = vmatmul.f32.gmra.mxu0 %v1233
    %v1355 = vpop.f32.mrf.mxu0
    %v1356 = vadd.f32 0.0, %v1355
    %1357 = vdwg.mxu0
    %1358 = vmatpush.msra.mxu0 %v1297
    %1359 = vmatpush.msra.mxu0 %v1293
    %1360 = vmatpush.msra.mxu0 %v1289
    %1361 = vmatpush.msra.mxu0 %v1285
    %1362 = vmatpush.msra.mxu0 %v1281
    %1363 = vmatpush.msra.mxu0 %v1277
    %1364 = vmatpush.msra.mxu0 %v1273
    %1365 = vmatpush.msra.mxu0 %v1269
    %1366 = vmatpush.msra.mxu0 %v1265
    %1367 = vmatpush.msra.mxu0 %v1261
    %1368 = vmatpush.msra.mxu0 %v1257
    %1369 = vmatpush.msra.mxu0 %v1253
    %1370 = vmatpush.msra.mxu0 %v1249
    %1371 = vmatpush.msra.mxu0 %v1245
    %1372 = vmatpush.msra.mxu0 %v1241
    %1373 = vmatpush.msra.mxu0 %v1237
    %1374 = vmatmul.f32.gmra.mxu0 %v1233
    %v1375 = vpop.f32.mrf.mxu0
    %v1376 = vadd.f32 0.0, %v1375
    %1377 = vdwg.mxu0
    %v1382 = vrot.slane %v1336, 6
    %v1383 = vrot.slane %v1356, 4
    %v1384 = vrot.slane %v1376, 2
    %v1385 = vsel %vm222, %v1316, %v1382
    %v1386 = vsel %vm224, %v1383, %v1384
    %v1387 = vsel %vm226, %v1385, %v1386
    %v1389 = vadd.f32 %v1232, %v1387
    %v1390 = vxor.u32 %v1389, 2147483648
    %v1391 = vmul.f32 %v1390, 1.442695
    %v1392 = vpow.pop %v1391
    %v1393 = vadd.f32 %v1392, 1.0
    %v1394 = vrcp.pop %v1393
    %v1395 = vmul.f32 %v1393, %v1394
    %v1396 = vsub.f32 1.0, %v1395
    %v1397 = vmul.f32 %v1394, %v1396
    %v1398 = vadd.f32 %v1394, %v1397
    %vm1399 = vweird.f32 %v1393
    %vm1400 = vweird.f32 %v1394
    %vm1401 = vmor %vm1399, %vm1400
    %v1402 = vsel %vm1401, %v1394, %v1398
    %v1403 = vand.u32 2147483647, %v1393
    %vm1404 = vcmp.eq.f32.partialorder %v1403, 8.507059e+37
    %v1405 = vand.u32 %v1393, 2147483648
    %v1406 = vor.u32 1.1754944e-38, %v1405
    %v1407 = vsel %vm1404, %v1406, %v1402
    %v1408 = vmul.f32 1.0, %v1407
    %v1410 = vrot.slane %v1389, 2
    %v1412 = vxor.u32 %v1410, 2147483648
    %v1413 = vmul.f32 %v1412, 1.442695
    %v1414 = vpow.pop %v1413
    %v1415 = vadd.f32 %v1414, 1.0
    %v1416 = vrcp.pop %v1415
    %v1417 = vmul.f32 %v1415, %v1416
    %v1418 = vsub.f32 1.0, %v1417
    %v1419 = vmul.f32 %v1416, %v1418
    %v1420 = vadd.f32 %v1416, %v1419
    %vm1421 = vweird.f32 %v1415
    %vm1422 = vweird.f32 %v1416
    %vm1423 = vmor %vm1421, %vm1422
    %v1424 = vsel %vm1423, %v1416, %v1420
    %v1425 = vand.u32 2147483647, %v1415
    %vm1426 = vcmp.eq.f32.partialorder %v1425, 8.507059e+37
    %v1427 = vand.u32 %v1415, 2147483648
    %v1428 = vor.u32 1.1754944e-38, %v1427
    %v1429 = vsel %vm1426, %v1428, %v1424
    %v1430 = vmul.f32 1.0, %v1429
    %v1431 = vrot.slane %v1389, 4
    %v1433 = vtanh.pop %v1431
    %v1434 = vrot.slane %v1389, 6
    %v1436 = vxor.u32 %v1434, 2147483648
    %v1437 = vmul.f32 %v1436, 1.442695
    %v1438 = vpow.pop %v1437
    %v1439 = vadd.f32 %v1438, 1.0
    %v1440 = vrcp.pop %v1439
    %v1441 = vmul.f32 %v1439, %v1440
    %v1442 = vsub.f32 1.0, %v1441
    %v1443 = vmul.f32 %v1440, %v1442
    %v1444 = vadd.f32 %v1440, %v1443
    %vm1445 = vweird.f32 %v1439
    %vm1446 = vweird.f32 %v1440
    %vm1447 = vmor %vm1445, %vm1446
    %v1448 = vsel %vm1447, %v1440, %v1444
    %v1449 = vand.u32 2147483647, %v1439
    %vm1450 = vcmp.eq.f32.partialorder %v1449, 8.507059e+37
    %v1451 = vand.u32 %v1439, 2147483648
    %v1452 = vor.u32 1.1754944e-38, %v1451
    %v1453 = vsel %vm1450, %v1452, %v1448
    %v1454 = vmul.f32 1.0, %v1453
    %v1455 = vld [vmem:[#allocation3] sm:$0x3]
    %v1456 = vmul.f32 %v1430, %v1455
    %v1457 = vmul.f32 %v1408, %v1433
    %v1458 = vadd.f32 %v1456, %v1457
    %1459 = vst [vmem:[#allocation3] sm:$0x3] %v1458
    %v1460 = vtanh.pop %v1458
    %v1461 = vmul.f32 %v1454, %v1460
    %1462 = vst [vmem:[#allocation2] sm:$0x3] %v1461
    %s1463 = scalar_lea.vmem %s0, 48
    %v1464 = vld [vmem:[%s1463] sm:$0xff]
    %v1465 = vld [vmem:[#allocation2] sm:$0x3]
    %v1466 = vld [vmem:[#allocation4] sm:$0xff]
    %v1467 = vld [vmem:[#allocation4 + $0x8] sm:$0xff]
    %v1468 = vld [vmem:[#allocation4 + $0x10] sm:$0xff]
    %v1469 = vld [vmem:[#allocation4 + $0x18] sm:$0xff]
    %v1470 = vld [vmem:[#allocation4 + $0x20] sm:$0xff]
    %v1471 = vld [vmem:[#allocation4 + $0x28] sm:$0xff]
    %v1472 = vld [vmem:[#allocation4 + $0x30] sm:$0xff]
    %v1473 = vld [vmem:[#allocation4 + $0x38] sm:$0xff]
    %v1474 = vld [vmem:[#allocation4 + $0x40] sm:$0xff]
    %v1475 = vld [vmem:[#allocation4 + $0x48] sm:$0xff]
    %v1476 = vld [vmem:[#allocation4 + $0x50] sm:$0xff]
    %v1477 = vld [vmem:[#allocation4 + $0x58] sm:$0xff]
    %v1478 = vld [vmem:[#allocation4 + $0x60] sm:$0xff]
    %v1479 = vld [vmem:[#allocation4 + $0x68] sm:$0xff]
    %v1480 = vld [vmem:[#allocation4 + $0x70] sm:$0xff]
    %v1481 = vld [vmem:[#allocation4 + $0x78] sm:$0xff]
    %v1482 = vld [vmem:[#allocation4 + $0x80] sm:$0xff]
    %v1483 = vld [vmem:[#allocation4 + $0x88] sm:$0xff]
    %v1484 = vld [vmem:[#allocation4 + $0x90] sm:$0xff]
    %v1485 = vld [vmem:[#allocation4 + $0x98] sm:$0xff]
    %v1486 = vld [vmem:[#allocation4 + $0xa0] sm:$0xff]
    %v1487 = vld [vmem:[#allocation4 + $0xa8] sm:$0xff]
    %v1488 = vld [vmem:[#allocation4 + $0xb0] sm:$0xff]
    %v1489 = vld [vmem:[#allocation4 + $0xb8] sm:$0xff]
    %v1490 = vld [vmem:[#allocation4 + $0xc0] sm:$0xff]
    %v1491 = vld [vmem:[#allocation4 + $0xc8] sm:$0xff]
    %v1492 = vld [vmem:[#allocation4 + $0xd0] sm:$0xff]
    %v1493 = vld [vmem:[#allocation4 + $0xd8] sm:$0xff]
    %v1494 = vld [vmem:[#allocation4 + $0xe0] sm:$0xff]
    %v1495 = vld [vmem:[#allocation4 + $0xe8] sm:$0xff]
    %v1496 = vld [vmem:[#allocation4 + $0xf0] sm:$0xff]
    %v1497 = vld [vmem:[#allocation4 + $0xf8] sm:$0xff]
    %v1498 = vld [vmem:[#allocation4 + $0x100] sm:$0xff]
    %v1499 = vld [vmem:[#allocation4 + $0x108] sm:$0xff]
    %v1500 = vld [vmem:[#allocation4 + $0x110] sm:$0xff]
    %v1501 = vld [vmem:[#allocation4 + $0x118] sm:$0xff]
    %v1502 = vld [vmem:[#allocation4 + $0x120] sm:$0xff]
    %v1503 = vld [vmem:[#allocation4 + $0x128] sm:$0xff]
    %v1504 = vld [vmem:[#allocation4 + $0x130] sm:$0xff]
    %v1505 = vld [vmem:[#allocation4 + $0x138] sm:$0xff]
    %v1506 = vld [vmem:[#allocation4 + $0x140] sm:$0xff]
    %v1507 = vld [vmem:[#allocation4 + $0x148] sm:$0xff]
    %v1508 = vld [vmem:[#allocation4 + $0x150] sm:$0xff]
    %v1509 = vld [vmem:[#allocation4 + $0x158] sm:$0xff]
    %v1510 = vld [vmem:[#allocation4 + $0x160] sm:$0xff]
    %v1511 = vld [vmem:[#allocation4 + $0x168] sm:$0xff]
    %v1512 = vld [vmem:[#allocation4 + $0x170] sm:$0xff]
    %v1513 = vld [vmem:[#allocation4 + $0x178] sm:$0xff]
    %v1514 = vld [vmem:[#allocation4 + $0x180] sm:$0xff]
    %v1515 = vld [vmem:[#allocation4 + $0x188] sm:$0xff]
    %v1516 = vld [vmem:[#allocation4 + $0x190] sm:$0xff]
    %v1517 = vld [vmem:[#allocation4 + $0x198] sm:$0xff]
    %v1518 = vld [vmem:[#allocation4 + $0x1a0] sm:$0xff]
    %v1519 = vld [vmem:[#allocation4 + $0x1a8] sm:$0xff]
    %v1520 = vld [vmem:[#allocation4 + $0x1b0] sm:$0xff]
    %v1521 = vld [vmem:[#allocation4 + $0x1b8] sm:$0xff]
    %v1522 = vld [vmem:[#allocation4 + $0x1c0] sm:$0xff]
    %v1523 = vld [vmem:[#allocation4 + $0x1c8] sm:$0xff]
    %v1524 = vld [vmem:[#allocation4 + $0x1d0] sm:$0xff]
    %v1525 = vld [vmem:[#allocation4 + $0x1d8] sm:$0xff]
    %v1526 = vld [vmem:[#allocation4 + $0x1e0] sm:$0xff]
    %v1527 = vld [vmem:[#allocation4 + $0x1e8] sm:$0xff]
    %v1528 = vld [vmem:[#allocation4 + $0x1f0] sm:$0xff]
    %v1529 = vld [vmem:[#allocation4 + $0x1f8] sm:$0xff]
    %1530 = vmatpush.msra.mxu0 %v1526
    %1531 = vmatpush.msra.mxu0 %v1522
    %1532 = vmatpush.msra.mxu0 %v1518
    %1533 = vmatpush.msra.mxu0 %v1514
    %1534 = vmatpush.msra.mxu0 %v1510
    %1535 = vmatpush.msra.mxu0 %v1506
    %1536 = vmatpush.msra.mxu0 %v1502
    %1537 = vmatpush.msra.mxu0 %v1498
    %1538 = vmatpush.msra.mxu0 %v1494
    %1539 = vmatpush.msra.mxu0 %v1490
    %1540 = vmatpush.msra.mxu0 %v1486
    %1541 = vmatpush.msra.mxu0 %v1482
    %1542 = vmatpush.msra.mxu0 %v1478
    %1543 = vmatpush.msra.mxu0 %v1474
    %1544 = vmatpush.msra.mxu0 %v1470
    %1545 = vmatpush.msra.mxu0 %v1466
    %1546 = vmatmul.f32.gmra.mxu0 %v1465
    %v1547 = vpop.f32.mrf.mxu0
    %v1548 = vadd.f32 0.0, %v1547
    %1549 = vdwg.mxu0
    %1550 = vmatpush.msra.mxu0 %v1527
    %1551 = vmatpush.msra.mxu0 %v1523
    %1552 = vmatpush.msra.mxu0 %v1519
    %1553 = vmatpush.msra.mxu0 %v1515
    %1554 = vmatpush.msra.mxu0 %v1511
    %1555 = vmatpush.msra.mxu0 %v1507
    %1556 = vmatpush.msra.mxu0 %v1503
    %1557 = vmatpush.msra.mxu0 %v1499
    %1558 = vmatpush.msra.mxu0 %v1495
    %1559 = vmatpush.msra.mxu0 %v1491
    %1560 = vmatpush.msra.mxu0 %v1487
    %1561 = vmatpush.msra.mxu0 %v1483
    %1562 = vmatpush.msra.mxu0 %v1479
    %1563 = vmatpush.msra.mxu0 %v1475
    %1564 = vmatpush.msra.mxu0 %v1471
    %1565 = vmatpush.msra.mxu0 %v1467
    %1566 = vmatmul.f32.gmra.mxu0 %v1465
    %v1567 = vpop.f32.mrf.mxu0
    %v1568 = vadd.f32 0.0, %v1567
    %1569 = vdwg.mxu0
    %1570 = vmatpush.msra.mxu0 %v1528
    %1571 = vmatpush.msra.mxu0 %v1524
    %1572 = vmatpush.msra.mxu0 %v1520
    %1573 = vmatpush.msra.mxu0 %v1516
    %1574 = vmatpush.msra.mxu0 %v1512
    %1575 = vmatpush.msra.mxu0 %v1508
    %1576 = vmatpush.msra.mxu0 %v1504
    %1577 = vmatpush.msra.mxu0 %v1500
    %1578 = vmatpush.msra.mxu0 %v1496
    %1579 = vmatpush.msra.mxu0 %v1492
    %1580 = vmatpush.msra.mxu0 %v1488
    %1581 = vmatpush.msra.mxu0 %v1484
    %1582 = vmatpush.msra.mxu0 %v1480
    %1583 = vmatpush.msra.mxu0 %v1476
    %1584 = vmatpush.msra.mxu0 %v1472
    %1585 = vmatpush.msra.mxu0 %v1468
    %1586 = vmatmul.f32.gmra.mxu0 %v1465
    %v1587 = vpop.f32.mrf.mxu0
    %v1588 = vadd.f32 0.0, %v1587
    %1589 = vdwg.mxu0
    %1590 = vmatpush.msra.mxu0 %v1529
    %1591 = vmatpush.msra.mxu0 %v1525
    %1592 = vmatpush.msra.mxu0 %v1521
    %1593 = vmatpush.msra.mxu0 %v1517
    %1594 = vmatpush.msra.mxu0 %v1513
    %1595 = vmatpush.msra.mxu0 %v1509
    %1596 = vmatpush.msra.mxu0 %v1505
    %1597 = vmatpush.msra.mxu0 %v1501
    %1598 = vmatpush.msra.mxu0 %v1497
    %1599 = vmatpush.msra.mxu0 %v1493
    %1600 = vmatpush.msra.mxu0 %v1489
    %1601 = vmatpush.msra.mxu0 %v1485
    %1602 = vmatpush.msra.mxu0 %v1481
    %1603 = vmatpush.msra.mxu0 %v1477
    %1604 = vmatpush.msra.mxu0 %v1473
    %1605 = vmatpush.msra.mxu0 %v1469
    %1606 = vmatmul.f32.gmra.mxu0 %v1465
    %v1607 = vpop.f32.mrf.mxu0
    %v1608 = vadd.f32 0.0, %v1607
    %1609 = vdwg.mxu0
    %v1614 = vrot.slane %v1568, 6
    %v1615 = vrot.slane %v1588, 4
    %v1616 = vrot.slane %v1608, 2
    %v1617 = vsel %vm222, %v1548, %v1614
    %v1618 = vsel %vm224, %v1615, %v1616
    %v1619 = vsel %vm226, %v1617, %v1618
    %v1621 = vadd.f32 %v1464, %v1619
    %v1622 = vxor.u32 %v1621, 2147483648
    %v1623 = vmul.f32 %v1622, 1.442695
    %v1624 = vpow.pop %v1623
    %v1625 = vadd.f32 %v1624, 1.0
    %v1626 = vrcp.pop %v1625
    %v1627 = vmul.f32 %v1625, %v1626
    %v1628 = vsub.f32 1.0, %v1627
    %v1629 = vmul.f32 %v1626, %v1628
    %v1630 = vadd.f32 %v1626, %v1629
    %vm1631 = vweird.f32 %v1625
    %vm1632 = vweird.f32 %v1626
    %vm1633 = vmor %vm1631, %vm1632
    %v1634 = vsel %vm1633, %v1626, %v1630
    %v1635 = vand.u32 2147483647, %v1625
    %vm1636 = vcmp.eq.f32.partialorder %v1635, 8.507059e+37
    %v1637 = vand.u32 %v1625, 2147483648
    %v1638 = vor.u32 1.1754944e-38, %v1637
    %v1639 = vsel %vm1636, %v1638, %v1634
    %v1640 = vmul.f32 1.0, %v1639
    %v1642 = vrot.slane %v1621, 2
    %v1644 = vxor.u32 %v1642, 2147483648
    %v1645 = vmul.f32 %v1644, 1.442695
    %v1646 = vpow.pop %v1645
    %v1647 = vadd.f32 %v1646, 1.0
    %v1648 = vrcp.pop %v1647
    %v1649 = vmul.f32 %v1647, %v1648
    %v1650 = vsub.f32 1.0, %v1649
    %v1651 = vmul.f32 %v1648, %v1650
    %v1652 = vadd.f32 %v1648, %v1651
    %vm1653 = vweird.f32 %v1647
    %vm1654 = vweird.f32 %v1648
    %vm1655 = vmor %vm1653, %vm1654
    %v1656 = vsel %vm1655, %v1648, %v1652
    %v1657 = vand.u32 2147483647, %v1647
    %vm1658 = vcmp.eq.f32.partialorder %v1657, 8.507059e+37
    %v1659 = vand.u32 %v1647, 2147483648
    %v1660 = vor.u32 1.1754944e-38, %v1659
    %v1661 = vsel %vm1658, %v1660, %v1656
    %v1662 = vmul.f32 1.0, %v1661
    %v1663 = vrot.slane %v1621, 4
    %v1665 = vtanh.pop %v1663
    %v1666 = vrot.slane %v1621, 6
    %v1668 = vxor.u32 %v1666, 2147483648
    %v1669 = vmul.f32 %v1668, 1.442695
    %v1670 = vpow.pop %v1669
    %v1671 = vadd.f32 %v1670, 1.0
    %v1672 = vrcp.pop %v1671
    %v1673 = vmul.f32 %v1671, %v1672
    %v1674 = vsub.f32 1.0, %v1673
    %v1675 = vmul.f32 %v1672, %v1674
    %v1676 = vadd.f32 %v1672, %v1675
    %vm1677 = vweird.f32 %v1671
    %vm1678 = vweird.f32 %v1672
    %vm1679 = vmor %vm1677, %vm1678
    %v1680 = vsel %vm1679, %v1672, %v1676
    %v1681 = vand.u32 2147483647, %v1671
    %vm1682 = vcmp.eq.f32.partialorder %v1681, 8.507059e+37
    %v1683 = vand.u32 %v1671, 2147483648
    %v1684 = vor.u32 1.1754944e-38, %v1683
    %v1685 = vsel %vm1682, %v1684, %v1680
    %v1686 = vmul.f32 1.0, %v1685
    %v1687 = vld [vmem:[#allocation3] sm:$0x3]
    %v1688 = vmul.f32 %v1662, %v1687
    %v1689 = vmul.f32 %v1640, %v1665
    %v1690 = vadd.f32 %v1688, %v1689
    %1691 = vst [vmem:[#allocation3] sm:$0x3] %v1690
    %v1692 = vtanh.pop %v1690
    %v1693 = vmul.f32 %v1686, %v1692
    %1694 = vst [vmem:[#allocation2] sm:$0x3] %v1693
    %s1695 = scalar_lea.vmem %s0, 56
    %v1696 = vld [vmem:[%s1695] sm:$0xff]
    %v1697 = vld [vmem:[#allocation2] sm:$0x3]
    %v1698 = vld [vmem:[#allocation4] sm:$0xff]
    %v1699 = vld [vmem:[#allocation4 + $0x8] sm:$0xff]
    %v1700 = vld [vmem:[#allocation4 + $0x10] sm:$0xff]
    %v1701 = vld [vmem:[#allocation4 + $0x18] sm:$0xff]
    %v1702 = vld [vmem:[#allocation4 + $0x20] sm:$0xff]
    %v1703 = vld [vmem:[#allocation4 + $0x28] sm:$0xff]
    %v1704 = vld [vmem:[#allocation4 + $0x30] sm:$0xff]
    %v1705 = vld [vmem:[#allocation4 + $0x38] sm:$0xff]
    %v1706 = vld [vmem:[#allocation4 + $0x40] sm:$0xff]
    %v1707 = vld [vmem:[#allocation4 + $0x48] sm:$0xff]
    %v1708 = vld [vmem:[#allocation4 + $0x50] sm:$0xff]
    %v1709 = vld [vmem:[#allocation4 + $0x58] sm:$0xff]
    %v1710 = vld [vmem:[#allocation4 + $0x60] sm:$0xff]
    %v1711 = vld [vmem:[#allocation4 + $0x68] sm:$0xff]
    %v1712 = vld [vmem:[#allocation4 + $0x70] sm:$0xff]
    %v1713 = vld [vmem:[#allocation4 + $0x78] sm:$0xff]
    %v1714 = vld [vmem:[#allocation4 + $0x80] sm:$0xff]
    %v1715 = vld [vmem:[#allocation4 + $0x88] sm:$0xff]
    %v1716 = vld [vmem:[#allocation4 + $0x90] sm:$0xff]
    %v1717 = vld [vmem:[#allocation4 + $0x98] sm:$0xff]
    %v1718 = vld [vmem:[#allocation4 + $0xa0] sm:$0xff]
    %v1719 = vld [vmem:[#allocation4 + $0xa8] sm:$0xff]
    %v1720 = vld [vmem:[#allocation4 + $0xb0] sm:$0xff]
    %v1721 = vld [vmem:[#allocation4 + $0xb8] sm:$0xff]
    %v1722 = vld [vmem:[#allocation4 + $0xc0] sm:$0xff]
    %v1723 = vld [vmem:[#allocation4 + $0xc8] sm:$0xff]
    %v1724 = vld [vmem:[#allocation4 + $0xd0] sm:$0xff]
    %v1725 = vld [vmem:[#allocation4 + $0xd8] sm:$0xff]
    %v1726 = vld [vmem:[#allocation4 + $0xe0] sm:$0xff]
    %v1727 = vld [vmem:[#allocation4 + $0xe8] sm:$0xff]
    %v1728 = vld [vmem:[#allocation4 + $0xf0] sm:$0xff]
    %v1729 = vld [vmem:[#allocation4 + $0xf8] sm:$0xff]
    %v1730 = vld [vmem:[#allocation4 + $0x100] sm:$0xff]
    %v1731 = vld [vmem:[#allocation4 + $0x108] sm:$0xff]
    %v1732 = vld [vmem:[#allocation4 + $0x110] sm:$0xff]
    %v1733 = vld [vmem:[#allocation4 + $0x118] sm:$0xff]
    %v1734 = vld [vmem:[#allocation4 + $0x120] sm:$0xff]
    %v1735 = vld [vmem:[#allocation4 + $0x128] sm:$0xff]
    %v1736 = vld [vmem:[#allocation4 + $0x130] sm:$0xff]
    %v1737 = vld [vmem:[#allocation4 + $0x138] sm:$0xff]
    %v1738 = vld [vmem:[#allocation4 + $0x140] sm:$0xff]
    %v1739 = vld [vmem:[#allocation4 + $0x148] sm:$0xff]
    %v1740 = vld [vmem:[#allocation4 + $0x150] sm:$0xff]
    %v1741 = vld [vmem:[#allocation4 + $0x158] sm:$0xff]
    %v1742 = vld [vmem:[#allocation4 + $0x160] sm:$0xff]
    %v1743 = vld [vmem:[#allocation4 + $0x168] sm:$0xff]
    %v1744 = vld [vmem:[#allocation4 + $0x170] sm:$0xff]
    %v1745 = vld [vmem:[#allocation4 + $0x178] sm:$0xff]
    %v1746 = vld [vmem:[#allocation4 + $0x180] sm:$0xff]
    %v1747 = vld [vmem:[#allocation4 + $0x188] sm:$0xff]
    %v1748 = vld [vmem:[#allocation4 + $0x190] sm:$0xff]
    %v1749 = vld [vmem:[#allocation4 + $0x198] sm:$0xff]
    %v1750 = vld [vmem:[#allocation4 + $0x1a0] sm:$0xff]
    %v1751 = vld [vmem:[#allocation4 + $0x1a8] sm:$0xff]
    %v1752 = vld [vmem:[#allocation4 + $0x1b0] sm:$0xff]
    %v1753 = vld [vmem:[#allocation4 + $0x1b8] sm:$0xff]
    %v1754 = vld [vmem:[#allocation4 + $0x1c0] sm:$0xff]
    %v1755 = vld [vmem:[#allocation4 + $0x1c8] sm:$0xff]
    %v1756 = vld [vmem:[#allocation4 + $0x1d0] sm:$0xff]
    %v1757 = vld [vmem:[#allocation4 + $0x1d8] sm:$0xff]
    %v1758 = vld [vmem:[#allocation4 + $0x1e0] sm:$0xff]
    %v1759 = vld [vmem:[#allocation4 + $0x1e8] sm:$0xff]
    %v1760 = vld [vmem:[#allocation4 + $0x1f0] sm:$0xff]
    %v1761 = vld [vmem:[#allocation4 + $0x1f8] sm:$0xff]
    %1762 = vmatpush.msra.mxu0 %v1758
    %1763 = vmatpush.msra.mxu0 %v1754
    %1764 = vmatpush.msra.mxu0 %v1750
    %1765 = vmatpush.msra.mxu0 %v1746
    %1766 = vmatpush.msra.mxu0 %v1742
    %1767 = vmatpush.msra.mxu0 %v1738
    %1768 = vmatpush.msra.mxu0 %v1734
    %1769 = vmatpush.msra.mxu0 %v1730
    %1770 = vmatpush.msra.mxu0 %v1726
    %1771 = vmatpush.msra.mxu0 %v1722
    %1772 = vmatpush.msra.mxu0 %v1718
    %1773 = vmatpush.msra.mxu0 %v1714
    %1774 = vmatpush.msra.mxu0 %v1710
    %1775 = vmatpush.msra.mxu0 %v1706
    %1776 = vmatpush.msra.mxu0 %v1702
    %1777 = vmatpush.msra.mxu0 %v1698
    %1778 = vmatmul.f32.gmra.mxu0 %v1697
    %v1779 = vpop.f32.mrf.mxu0
    %v1780 = vadd.f32 0.0, %v1779
    %1781 = vdwg.mxu0
    %1782 = vmatpush.msra.mxu0 %v1759
    %1783 = vmatpush.msra.mxu0 %v1755
    %1784 = vmatpush.msra.mxu0 %v1751
    %1785 = vmatpush.msra.mxu0 %v1747
    %1786 = vmatpush.msra.mxu0 %v1743
    %1787 = vmatpush.msra.mxu0 %v1739
    %1788 = vmatpush.msra.mxu0 %v1735
    %1789 = vmatpush.msra.mxu0 %v1731
    %1790 = vmatpush.msra.mxu0 %v1727
    %1791 = vmatpush.msra.mxu0 %v1723
    %1792 = vmatpush.msra.mxu0 %v1719
    %1793 = vmatpush.msra.mxu0 %v1715
    %1794 = vmatpush.msra.mxu0 %v1711
    %1795 = vmatpush.msra.mxu0 %v1707
    %1796 = vmatpush.msra.mxu0 %v1703
    %1797 = vmatpush.msra.mxu0 %v1699
    %1798 = vmatmul.f32.gmra.mxu0 %v1697
    %v1799 = vpop.f32.mrf.mxu0
    %v1800 = vadd.f32 0.0, %v1799
    %1801 = vdwg.mxu0
    %1802 = vmatpush.msra.mxu0 %v1760
    %1803 = vmatpush.msra.mxu0 %v1756
    %1804 = vmatpush.msra.mxu0 %v1752
    %1805 = vmatpush.msra.mxu0 %v1748
    %1806 = vmatpush.msra.mxu0 %v1744
    %1807 = vmatpush.msra.mxu0 %v1740
    %1808 = vmatpush.msra.mxu0 %v1736
    %1809 = vmatpush.msra.mxu0 %v1732
    %1810 = vmatpush.msra.mxu0 %v1728
    %1811 = vmatpush.msra.mxu0 %v1724
    %1812 = vmatpush.msra.mxu0 %v1720
    %1813 = vmatpush.msra.mxu0 %v1716
    %1814 = vmatpush.msra.mxu0 %v1712
    %1815 = vmatpush.msra.mxu0 %v1708
    %1816 = vmatpush.msra.mxu0 %v1704
    %1817 = vmatpush.msra.mxu0 %v1700
    %1818 = vmatmul.f32.gmra.mxu0 %v1697
    %v1819 = vpop.f32.mrf.mxu0
    %v1820 = vadd.f32 0.0, %v1819
    %1821 = vdwg.mxu0
    %1822 = vmatpush.msra.mxu0 %v1761
    %1823 = vmatpush.msra.mxu0 %v1757
    %1824 = vmatpush.msra.mxu0 %v1753
    %1825 = vmatpush.msra.mxu0 %v1749
    %1826 = vmatpush.msra.mxu0 %v1745
    %1827 = vmatpush.msra.mxu0 %v1741
    %1828 = vmatpush.msra.mxu0 %v1737
    %1829 = vmatpush.msra.mxu0 %v1733
    %1830 = vmatpush.msra.mxu0 %v1729
    %1831 = vmatpush.msra.mxu0 %v1725
    %1832 = vmatpush.msra.mxu0 %v1721
    %1833 = vmatpush.msra.mxu0 %v1717
    %1834 = vmatpush.msra.mxu0 %v1713
    %1835 = vmatpush.msra.mxu0 %v1709
    %1836 = vmatpush.msra.mxu0 %v1705
    %1837 = vmatpush.msra.mxu0 %v1701
    %1838 = vmatmul.f32.gmra.mxu0 %v1697
    %v1839 = vpop.f32.mrf.mxu0
    %v1840 = vadd.f32 0.0, %v1839
    %1841 = vdwg.mxu0
    %v1846 = vrot.slane %v1800, 6
    %v1847 = vrot.slane %v1820, 4
    %v1848 = vrot.slane %v1840, 2
    %v1849 = vsel %vm222, %v1780, %v1846
    %v1850 = vsel %vm224, %v1847, %v1848
    %v1851 = vsel %vm226, %v1849, %v1850
    %v1853 = vadd.f32 %v1696, %v1851
    %v1854 = vxor.u32 %v1853, 2147483648
    %v1855 = vmul.f32 %v1854, 1.442695
    %v1856 = vpow.pop %v1855
    %v1857 = vadd.f32 %v1856, 1.0
    %v1858 = vrcp.pop %v1857
    %v1859 = vmul.f32 %v1857, %v1858
    %v1860 = vsub.f32 1.0, %v1859
    %v1861 = vmul.f32 %v1858, %v1860
    %v1862 = vadd.f32 %v1858, %v1861
    %vm1863 = vweird.f32 %v1857
    %vm1864 = vweird.f32 %v1858
    %vm1865 = vmor %vm1863, %vm1864
    %v1866 = vsel %vm1865, %v1858, %v1862
    %v1867 = vand.u32 2147483647, %v1857
    %vm1868 = vcmp.eq.f32.partialorder %v1867, 8.507059e+37
    %v1869 = vand.u32 %v1857, 2147483648
    %v1870 = vor.u32 1.1754944e-38, %v1869
    %v1871 = vsel %vm1868, %v1870, %v1866
    %v1872 = vmul.f32 1.0, %v1871
    %v1874 = vrot.slane %v1853, 2
    %v1876 = vxor.u32 %v1874, 2147483648
    %v1877 = vmul.f32 %v1876, 1.442695
    %v1878 = vpow.pop %v1877
    %v1879 = vadd.f32 %v1878, 1.0
    %v1880 = vrcp.pop %v1879
    %v1881 = vmul.f32 %v1879, %v1880
    %v1882 = vsub.f32 1.0, %v1881
    %v1883 = vmul.f32 %v1880, %v1882
    %v1884 = vadd.f32 %v1880, %v1883
    %vm1885 = vweird.f32 %v1879
    %vm1886 = vweird.f32 %v1880
    %vm1887 = vmor %vm1885, %vm1886
    %v1888 = vsel %vm1887, %v1880, %v1884
    %v1889 = vand.u32 2147483647, %v1879
    %vm1890 = vcmp.eq.f32.partialorder %v1889, 8.507059e+37
    %v1891 = vand.u32 %v1879, 2147483648
    %v1892 = vor.u32 1.1754944e-38, %v1891
    %v1893 = vsel %vm1890, %v1892, %v1888
    %v1894 = vmul.f32 1.0, %v1893
    %v1895 = vrot.slane %v1853, 4
    %v1897 = vtanh.pop %v1895
    %v1898 = vrot.slane %v1853, 6
    %v1900 = vxor.u32 %v1898, 2147483648
    %v1901 = vmul.f32 %v1900, 1.442695
    %v1902 = vpow.pop %v1901
    %v1903 = vadd.f32 %v1902, 1.0
    %v1904 = vrcp.pop %v1903
    %v1905 = vmul.f32 %v1903, %v1904
    %v1906 = vsub.f32 1.0, %v1905
    %v1907 = vmul.f32 %v1904, %v1906
    %v1908 = vadd.f32 %v1904, %v1907
    %vm1909 = vweird.f32 %v1903
    %vm1910 = vweird.f32 %v1904
    %vm1911 = vmor %vm1909, %vm1910
    %v1912 = vsel %vm1911, %v1904, %v1908
    %v1913 = vand.u32 2147483647, %v1903
    %vm1914 = vcmp.eq.f32.partialorder %v1913, 8.507059e+37
    %v1915 = vand.u32 %v1903, 2147483648
    %v1916 = vor.u32 1.1754944e-38, %v1915
    %v1917 = vsel %vm1914, %v1916, %v1912
    %v1918 = vmul.f32 1.0, %v1917
    %v1919 = vld [vmem:[#allocation3] sm:$0x3]
    %v1920 = vmul.f32 %v1894, %v1919
    %v1921 = vmul.f32 %v1872, %v1897
    %v1922 = vadd.f32 %v1920, %v1921
    %1923 = vst [vmem:[#allocation3] sm:$0x3] %v1922
    %v1924 = vtanh.pop %v1922
    %v1925 = vmul.f32 %v1918, %v1924
    %1926 = vst [vmem:[#allocation2] sm:$0x3] %v1925
    // Predicated region
    $region34: #{fixed_demo_net_simple.1} parent=1 // pred_check
      %p1927 = pneg %p63
    $region35: #{fixed_demo_net_simple.1} parent=1 // pred_check_branch
      %1929 = sbr.rel (%p1927) target = $region37
    $region36: #{fixed_demo_net_simple.1} parent=1 // pred_region
      %v1930 = vld [vmem:[#allocation2] sm:$0x3]
      %v1931 = vld [vmem:[#allocation7] sm:$0xff]
      %v1932 = vld [vmem:[#allocation7 + $0x8] sm:$0xff]
      %v1933 = vld [vmem:[#allocation7 + $0x10] sm:$0xff]
      %v1934 = vld [vmem:[#allocation7 + $0x18] sm:$0xff]
      %v1935 = vld [vmem:[#allocation7 + $0x20] sm:$0xff]
      %v1936 = vld [vmem:[#allocation7 + $0x28] sm:$0xff]
      %v1937 = vld [vmem:[#allocation7 + $0x30] sm:$0xff]
      %v1938 = vld [vmem:[#allocation7 + $0x38] sm:$0xff]
      %v1939 = vld [vmem:[#allocation7 + $0x40] sm:$0xff]
      %v1940 = vld [vmem:[#allocation7 + $0x48] sm:$0xff]
      %v1941 = vld [vmem:[#allocation7 + $0x50] sm:$0xff]
      %v1942 = vld [vmem:[#allocation7 + $0x58] sm:$0xff]
      %v1943 = vld [vmem:[#allocation7 + $0x60] sm:$0xff]
      %v1944 = vld [vmem:[#allocation7 + $0x68] sm:$0xff]
      %v1945 = vld [vmem:[#allocation7 + $0x70] sm:$0xff]
      %v1946 = vld [vmem:[#allocation7 + $0x78] sm:$0xff]
      %v1947 = vld [vmem:[#allocation9] sm:$0x1]
      %v1949 = vperm.slane %v1947, 0
      %1951 = vmatpush.msra.mxu0 %v1946
      %1952 = vmatpush.msra.mxu0 %v1945
      %1953 = vmatpush.msra.mxu0 %v1944
      %1954 = vmatpush.msra.mxu0 %v1943
      %1955 = vmatpush.msra.mxu0 %v1942
      %1956 = vmatpush.msra.mxu0 %v1941
      %1957 = vmatpush.msra.mxu0 %v1940
      %1958 = vmatpush.msra.mxu0 %v1939
      %1959 = vmatpush.msra.mxu0 %v1938
      %1960 = vmatpush.msra.mxu0 %v1937
      %1961 = vmatpush.msra.mxu0 %v1936
      %1962 = vmatpush.msra.mxu0 %v1935
      %1963 = vmatpush.msra.mxu0 %v1934
      %1964 = vmatpush.msra.mxu0 %v1933
      %1965 = vmatpush.msra.mxu0 %v1932
      %1966 = vmatpush.msra.mxu0 %v1931
      %1967 = vmatmul.f32.gmra.mxu0 %v1930
      %v1968 = vpop.f32.mrf.mxu0
      %v1969 = vadd.f32 %v1949, %v1968
      %1970 = vdwg.mxu0
      %1971 = vst [vmem:[#allocation10] sm:$0x3] %v1969
    $region37: #{fixed_demo_net_simple.1} parent=1 // pred_fallthru
      _
    // Predicated region
    $region38: #{fixed_demo_net_simple.1} parent=1 // pred_check
      _
    $region39: #{fixed_demo_net_simple.1} parent=1 // pred_check_branch
      %1973 = sbr.rel (0) target = $region41
    $region40: #{fixed_demo_net_simple.1} parent=1 // pred_region
      %1975 = vsyncadd [#allocation6], 0
      %s1977 = sshll.u32 [#allocation10], 4
      %s1978 = int_to_ptr.vmem [resolvable:$true] %s1977
      %s1979 = sshll.u32 %s4, 4
      %s1980 = int_to_ptr.hbm [resolvable:$true] %s1979
      %1982 = dma.vmem_to_hbm [thread:$0]  %s1978, 32, %s1980, [#allocation6]
    $region41: #{fixed_demo_net_simple.1} parent=1 // pred_fallthru
      _
    // Predicated region
    $region42: #{fixed_demo_net_simple.1} parent=1 // pred_check
      _
    $region43: #{fixed_demo_net_simple.1} parent=1 // pred_check_branch
      %1984 = sbr.rel (0) target = $region45
    $region44: #{fixed_demo_net_simple.1} parent=1 // pred_region
      %1986 = dma.done [#allocation6], 32
    $region45: #{fixed_demo_net_simple.1} parent=1 // pred_fallthru
      _
    %1987 = vsyncpa [#allocation5], 1
    %1988 = vsyncpa [#allocation8], 1
    %1989 = vsyncpa [#allocation6], 1

</llo_original>
